<compile_context>
chip_gen: v6e
topology: v6e:2x2x1
jax: 0.10.0
libtpu: 0.0.40
codegen_flags: <defaults>
</compile_context>

<pallas_src>
import functools
import math

import jax
import jax.numpy as jnp
from jax.experimental import pallas as pl
from jax.experimental.pallas import tpu as pltpu

_LANES = 128
_SUBLANES = 8
_MAX_LANE = 2048                 # lane (last-dim) width cap, multiple of 128
_MAX_BUDGET = 96 << 20           # cap on double-buffered working-set budget
_MIN_KERNEL_BYTES = 256 << 10    # below this per branch -> plain XLA fusion


def _vmem_capacity_bytes() -> int:
    """Physical VMEM per TensorCore; conservative fallback if unavailable."""
    try:
        cap = int(getattr(pltpu.get_tpu_info(), "vmem_capacity_bytes", 0))
        if cap > 0:
            return cap
    except Exception:
        pass
    return 64 << 20  # v7x per-TC VMEM (most restrictive generation)


# --------------------------------------------------------------------------
# Kernel
# --------------------------------------------------------------------------
def _combiner_kernel(theta_ref, *refs, n_branches):
    # theta_ref : SMEM (n_branches,) f32 (scalar-prefetched NAS weights)
    # refs      : n_branches VMEM input tiles (row_tile, lane) in native dtype,
    #             followed by one VMEM output tile (row_tile, lane).
    x_refs = refs[:n_branches]
    o_ref = refs[n_branches]
    # Upcast in-register, accumulate in f32 (VPU), store in output dtype.
    acc = theta_ref[0] * x_refs[0][...].astype(jnp.float32)
    for i in range(1, n_branches):          # n_branches is small & static
        acc = acc + theta_ref[i] * x_refs[i][...].astype(jnp.float32)
    o_ref[...] = acc.astype(o_ref.dtype)


# --------------------------------------------------------------------------
# Layout / tiling selection
# --------------------------------------------------------------------------
def _pick_layout(n_elem, n_branches, dtype, target_tile_bytes=None):
    """Choose (lane, rows, row_tile) for the flattened (rows, lane) layout.

    Precondition: n_elem % 128 == 0 (checked by the caller).  `lane` is chosen
    so it divides n_elem exactly -> no padding, no output slice.
    """
    itemsize = jnp.dtype(dtype).itemsize
    # Sublane packing: 8 for 4-byte, 16 for 2-byte, 32 for 1-byte dtypes.
    sub = _SUBLANES * max(1, 4 // itemsize)

    # Lane (last) dim: widest power-of-two <= _MAX_LANE that divides n_elem.
    lane = _LANES
    while (lane * 2 <= _MAX_LANE
           and n_elem % (lane * 2) == 0
           and (lane * 2) * sub <= n_elem):
        lane *= 2
    rows = n_elem // lane                              # exact, no padding

    # Per-branch tile bytes from the generation's VMEM capacity, bounded by a
    # double-buffered working set 2 * (n_branches inputs + 1 output) * tile.
    cap = _vmem_capacity_bytes()
    budget = min(int(cap * 0.6), _MAX_BUDGET)          # ~38 MiB v7x, ~77 MiB v5e/v6e
    if target_tile_bytes is None:
        target_tile_bytes = (4 << 20) if cap <= (64 << 20) else (8 << 20)
    per_branch = max(lane * sub * itemsize,
                     min(target_tile_bytes, budget // (2 * (n_branches + 1))))
    row_tile = max(sub, (per_branch // (lane * itemsize)) // sub * sub)
    # Never bigger than the whole (sub-aligned) row extent.
    row_tile = min(row_tile, pl.cdiv(rows, sub) * sub)
    return lane, rows, row_tile


# --------------------------------------------------------------------------
# pallas_call wrapper
# --------------------------------------------------------------------------
def _weighted_sum_pallas(theta, flats, *, row_tile, out_dtype):
    """flats: list of n_branches arrays, each (rows, lane) in native dtype."""
    n_branches = len(flats)
    rows, lane = flats[0].shape
    grid = (pl.cdiv(rows, row_tile),)      # partial last block masked by Pallas

    in_itemsize = jnp.dtype(flats[0].dtype).itemsize
    out_itemsize = jnp.dtype(out_dtype).itemsize
    vmem_needed = 2 * row_tile * lane * (n_branches * in_itemsize + out_itemsize)
    cap = _vmem_capacity_bytes()
    # >= 32 MiB so v5e's 16 MiB scoped default never caps us; <= physical VMEM.
    vmem_limit = min(max(vmem_needed + (4 << 20), 32 << 20), cap)

    kernel = functools.partial(_combiner_kernel, n_branches=n_branches)
    block = pl.BlockSpec((row_tile, lane), lambda i, theta_ref: (i, 0))

    # TODO(synk): on v7x, try pltpu.CORE_PARALLEL (or pl.core_map over a
    # 2-TensorCore mesh) for the row-tile axis to guarantee both cores stream.
    return pl.pallas_call(
        kernel,
        out_shape=jax.ShapeDtypeStruct((rows, lane), out_dtype),
        grid_spec=pltpu.PrefetchScalarGridSpec(
            num_scalar_prefetch=1,          # theta lands in SMEM
            grid=grid,
            in_specs=[block] * n_branches,
            out_specs=pl.BlockSpec((row_tile, lane), lambda i, theta_ref: (i, 0)),
        ),
        compiler_params=pltpu.CompilerParams(
            dimension_semantics=("parallel",),
            vmem_limit_bytes=vmem_limit,
        ),
    )(theta, *flats)


# --------------------------------------------------------------------------
# Module (forward-path re-implementation)
# --------------------------------------------------------------------------
class SuperNetCombiner:
    """JAX/Pallas re-implementation of plinio SuperNetCombiner (forward path)."""

    def __init__(self, n_branches: int, gumbel_softmax: bool, hard_softmax: bool):
        self.n_branches = n_branches
        self.hard_softmax = hard_softmax
        self.gumbel_softmax = gumbel_softmax
        self.training = False
        self._softmax_temperature = 1.0
        # nn.Parameter(1/n_branches * ones(n_branches)) -- deterministic init.
        self.alpha = jnp.full((n_branches,), 1.0 / n_branches, dtype=jnp.float32)
        self.theta_alpha = self.alpha
        self._rng_key = jax.random.PRNGKey(0)

    @property
    def softmax_temperature(self) -> float:
        return self._softmax_temperature

    @softmax_temperature.setter
    def softmax_temperature(self, value: float):
        self._softmax_temperature = float(value)

    # ---- alpha sampling (tiny parameter-side logic, kept in plain JAX) ----
    def sample_alpha_sm(self):
        theta = jax.nn.softmax(self.alpha / self._softmax_temperature, axis=0)
        if self.hard_softmax:
            theta = jax.nn.one_hot(
                jnp.argmax(theta, axis=0), self.n_branches, dtype=jnp.float32)
        self.theta_alpha = theta

    def sample_alpha_gs(self, key=None):
        if self.training:
            if key is None:
                self._rng_key, key = jax.random.split(self._rng_key)
            u = jax.random.uniform(key, (self.n_branches,), dtype=jnp.float32,
                                   minval=1e-6, maxval=1.0 - 1e-6)
            g = -jnp.log(-jnp.log(u))
            theta = jax.nn.softmax(
                (self.alpha + g) / self._softmax_temperature, axis=0)
            if self.hard_softmax:
                hard = jax.nn.one_hot(
                    jnp.argmax(theta, axis=0), self.n_branches, dtype=jnp.float32)
                theta = jax.lax.stop_gradient(hard - theta) + theta
            self.theta_alpha = theta
        else:
            self.sample_alpha_sm()

    def sample_alpha(self):
        if self.gumbel_softmax:
            self.sample_alpha_gs()
        else:
            self.sample_alpha_sm()

    def best_layer_index(self) -> int:
        # Host-side query API (returns a Python int); not on the forward hot path.
        return int(jnp.argmax(self.alpha))

    # ---- forward: the weighted-sum hot path runs in the Pallas kernel ----
    # TODO(synk): theta_alpha / _rng_key are mutable state on self; pass them
    # functionally if this wrapper is ever wrapped in jax.jit.
    def __call__(self, layers_outputs):
        self.sample_alpha()
        assert len(layers_outputs) == self.n_branches
        shape = layers_outputs[0].shape
        dtype = layers_outputs[0].dtype

        if self.hard_softmax:
            # Only one branch contributes; select it on-device (no host sync,
            # no n_branches x HBM reads).  Forward value is identical.
            # TODO(synk): straight-through gradient through theta is dropped
            # here (forward-only scope).
            idx = jnp.argmax(self.theta_alpha)
            return jax.lax.switch(
                idx, [lambda i=i: layers_outputs[i] for i in range(self.n_branches)])

        theta = self.theta_alpha.astype(jnp.float32)
        n_elem = math.prod(shape)
        itemsize = jnp.dtype(dtype).itemsize

        # Small / oddly-sized tensors: a single fused XLA elementwise op beats
        # pallas_call launch + layout plumbing.
        if n_elem * itemsize < _MIN_KERNEL_BYTES or n_elem % _LANES != 0:
            acc = theta[0] * layers_outputs[0].astype(jnp.float32)
            for i in range(1, self.n_branches):
                acc = acc + theta[i] * layers_outputs[i].astype(jnp.float32)
            return acc.astype(dtype)

        # TODO(synk): if n_branches ever grows beyond ~6, switch to a 2-D grid
        # with a branch ('arbitrary') axis + f32 VMEM accumulator scratch so the
        # per-branch tile does not shrink with branch count.
        lane, rows, row_tile = _pick_layout(n_elem, self.n_branches, dtype)

        # Lane-dense (rows, lane) views (contiguous reshape == free); no pad,
        # no output slice — the partial last row-block is masked by Pallas.
        flats = [jnp.reshape(yi, (rows, lane)) for yi in layers_outputs]
        out2d = _weighted_sum_pallas(theta, flats, row_tile=row_tile,
                                     out_dtype=dtype)
        return jnp.reshape(out2d, shape)


# --------------------------------------------------------------------------
# Test
# --------------------------------------------------------------------------
def _tol(dtype):
    # bf16 output carries ~0.4% quantization (one ulp); f32 is exact to ~1e-7.
    if jnp.dtype(dtype) == jnp.dtype(jnp.bfloat16):
        return dict(atol=5e-2, rtol=5e-2)
    return dict(atol=1e-5, rtol=1e-5)


if __name__ == "__main__":
    key = jax.random.PRNGKey(0)
    n_branches = 3

    def run_case(case_id, shape, dtype):
        ks = jax.random.split(jax.random.fold_in(key, case_id), n_branches)
        layers_outputs = [jax.random.normal(k, shape, dtype=dtype) for k in ks]
        combiner = SuperNetCombiner(n_branches=n_branches,
                                    gumbel_softmax=False, hard_softmax=False)
        y = jax.block_until_ready(combiner(layers_outputs))
        theta_ref = jax.nn.softmax(combiner.alpha / combiner.softmax_temperature)
        y_ref = sum(theta_ref[i] * layers_outputs[i].astype(jnp.float32)
                    for i in range(n_branches))
        assert y.shape == shape and y.dtype == dtype, shape
        assert jnp.allclose(y.astype(jnp.float32), y_ref, **_tol(dtype)), shape

    # Small shapes consistent with the module -> fused-XLA fallback path.
    run_case(0, (2, 4, 16, 16), jnp.float32)
    run_case(1, (2, 8, 32, 32), jnp.bfloat16)
    # Larger activations -> Pallas kernel path (lane-dense, no pad/slice).
    run_case(2, (2, 32, 64, 64), jnp.float32)
    run_case(3, (4, 16, 64, 66), jnp.bfloat16)   # partial (masked) final block

    # Direct kernel test: grid > 1 with a masked partial last row-block.
    rows, lane, row_tile = 200, 256, 64
    ks = jax.random.split(jax.random.fold_in(key, 100), n_branches)
    xs = [jax.random.normal(k, (rows, lane), dtype=jnp.float32) for k in ks]
    theta = jax.nn.softmax(jnp.arange(n_branches, dtype=jnp.float32))
    y = jax.block_until_ready(
        _weighted_sum_pallas(theta, xs, row_tile=row_tile, out_dtype=jnp.float32))
    y_ref = sum(theta[i] * xs[i] for i in range(n_branches))
    assert jnp.allclose(y, y_ref, atol=1e-5, rtol=1e-5)

    # Hard-softmax fast path: on-device branch select, no weighted sum.
    combiner = SuperNetCombiner(n_branches=n_branches,
                                gumbel_softmax=False, hard_softmax=True)
    ks = jax.random.split(jax.random.fold_in(key, 200), n_branches)
    outs = [jax.random.normal(k, (2, 4, 16, 16), dtype=jnp.float32) for k in ks]
    y = jax.block_until_ready(combiner(outs))
    idx = int(jnp.argmax(combiner.theta_alpha))
    assert jnp.array_equal(y, outs[idx])

    print("KERNEL_OK")
</pallas_src>

<mosaic_0001>
module attributes {stable_mosaic.version = 11 : i64} {
  func.func @_combiner_kernel(%arg0: i32, %arg1: memref<3xf32, #tpu.memory_space<smem>>, %arg2: memref<128x2048xf32, #tpu.memory_space<vmem>>, %arg3: memref<128x2048xf32, #tpu.memory_space<vmem>>, %arg4: memref<128x2048xf32, #tpu.memory_space<vmem>>, %arg5: memref<128x2048xf32, #tpu.memory_space<vmem>>) attributes {dimension_semantics = [#tpu.dimension_semantics<parallel>], iteration_bounds = array<i64: 1>, scalar_prefetch = 1 : i64, scratch_operands = 0 : i64, tpu.core_type = #tpu.core_type<tc>, window_params = [{transform_indices = @transform_0, window_bounds = array<i64: 128, 2048>}, {transform_indices = @transform_1, window_bounds = array<i64: 128, 2048>}, {transform_indices = @transform_2, window_bounds = array<i64: 128, 2048>}, {transform_indices = @transform_3, window_bounds = array<i64: 128, 2048>}]} {
    %c0 = arith.constant 0 : index
    %0 = memref.load %arg1[%c0] : memref<3xf32, #tpu.memory_space<smem>>
    %c0_0 = arith.constant 0 : index
    %c0_1 = arith.constant 0 : index
    %1 = vector.load %arg2[%c0_0, %c0_1] : memref<128x2048xf32, #tpu.memory_space<vmem>>, vector<128x2048xf32>
    %2 = vector.broadcast %0 : f32 to vector<128x2048xf32>
    %3 = arith.mulf %2, %1 : vector<128x2048xf32>
    %c1 = arith.constant 1 : index
    %4 = memref.load %arg1[%c1] : memref<3xf32, #tpu.memory_space<smem>>
    %c0_2 = arith.constant 0 : index
    %c0_3 = arith.constant 0 : index
    %5 = vector.load %arg3[%c0_2, %c0_3] : memref<128x2048xf32, #tpu.memory_space<vmem>>, vector<128x2048xf32>
    %6 = vector.broadcast %4 : f32 to vector<128x2048xf32>
    %7 = arith.mulf %6, %5 : vector<128x2048xf32>
    %8 = arith.addf %3, %7 : vector<128x2048xf32>
    %c2 = arith.constant 2 : index
    %9 = memref.load %arg1[%c2] : memref<3xf32, #tpu.memory_space<smem>>
    %c0_4 = arith.constant 0 : index
    %c0_5 = arith.constant 0 : index
    %10 = vector.load %arg4[%c0_4, %c0_5] : memref<128x2048xf32, #tpu.memory_space<vmem>>, vector<128x2048xf32>
    %11 = vector.broadcast %9 : f32 to vector<128x2048xf32>
    %12 = arith.mulf %11, %10 : vector<128x2048xf32>
    %13 = arith.addf %8, %12 : vector<128x2048xf32>
    %c0_6 = arith.constant 0 : index
    %c0_7 = arith.constant 0 : index
    %14 = vector.load %arg5[%c0_6, %c0_7] : memref<128x2048xf32, #tpu.memory_space<vmem>>, vector<128x2048xf32>
    tpu.vector_store %arg5[%c0_6, %c0_7], %13 {strides = array<i32>} : memref<128x2048xf32, #tpu.memory_space<vmem>>, vector<128x2048xf32>,
    return
  }
  func.func @transform_0(%arg0: i32, %arg1: memref<3xf32, #tpu.memory_space<smem>>) -> (i32, i32) {
    %c0_i32 = arith.constant 0 : i32
    %c0_i32_0 = arith.constant 0 : i32
    return %arg0, %c0_i32 : i32, i32
  }
  func.func @transform_1(%arg0: i32, %arg1: memref<3xf32, #tpu.memory_space<smem>>) -> (i32, i32) {
    %c0_i32 = arith.constant 0 : i32
    %c0_i32_0 = arith.constant 0 : i32
    return %arg0, %c0_i32 : i32, i32
  }
  func.func @transform_2(%arg0: i32, %arg1: memref<3xf32, #tpu.memory_space<smem>>) -> (i32, i32) {
    %c0_i32 = arith.constant 0 : i32
    %c0_i32_0 = arith.constant 0 : i32
    return %arg0, %c0_i32 : i32, i32
  }
  func.func @transform_3(%arg0: i32, %arg1: memref<3xf32, #tpu.memory_space<smem>>) -> (i32, i32) {
    %c0_i32 = arith.constant 0 : i32
    %c0_i32_0 = arith.constant 0 : i32
    return %arg0, %c0_i32 : i32, i32
  }
}

</mosaic_0001>

<llo_original>
// kernel: tpu_custom_call.1
$region0: #{tpu_custom_call.1}
  #allocation0 [shape = 'u32[]', space=smem, size = 0x4, offset = 0x4, fixed_abs, tag = 'smem constant byte address 0x4 - core index']
  #allocation1 [shape = 'u32[144,128]{1,0:T(1,128)}', space=vmem, size = 0x12000, scoped, tag = 'internal scratch']
  #allocation2 [shape = 's32[1]{0}', space=sflag, size = 0x4, scoped, tag = 'scoped memory for tpu_custom_call.1']
  #allocation3 [shape = 'u8[512]{0}', space=smem, size = 0x200, scoped, tag = 'prefetched SMEM operand 0']
  %s0 = inlined_call_operand.hbm [shape: f32[3], index: 0, kind: input, shape index: {}]
  %s1 = inlined_call_operand.hbm [shape: f32[128,2048], index: 1, kind: input, shape index: {}]
  %s2 = inlined_call_operand.hbm [shape: f32[128,2048], index: 2, kind: input, shape index: {}]
  %s3 = inlined_call_operand.hbm [shape: f32[128,2048], index: 3, kind: input, shape index: {}]
  %s4 = inlined_call_operand.hbm [shape: f32[128,2048], index: 4, kind: output, shape index: {}]
  %s5 = sld [smem:[#allocation0]]
  $region34: #{tpu_custom_call.1} parent=0
    _
  %s7 = ssub.s32 1, %s5
  %s8 = scalar_select 0, %s7, %s5
  %10 = dma.hbm_to_smem %s0, 16, [#allocation3], [#allocation2]
  %11 = dma.done [#allocation2], 16
  %12 = sfence
  $region1: #{tpu_custom_call.1} parent=0
    #allocation4 [shape = 'u8[1048576]{0}', space=vmem, size = 0x100000, scoped, tag = 'input window, operand 1, single buffered']
    #allocation5 [shape = 's32[1]{0}', space=sflag, size = 0x4, scoped, tag = 'scoped memory for tpu_custom_call.1']
    #allocation6 [shape = 's32[1]{0}', space=sflag, size = 0x4, scoped, tag = 'scoped memory for tpu_custom_call.1']
    #allocation7 [shape = 'u8[1048576]{0}', space=vmem, size = 0x100000, scoped, tag = 'input window, operand 2, single buffered']
    #allocation8 [shape = 's32[1]{0}', space=sflag, size = 0x4, scoped, tag = 'scoped memory for tpu_custom_call.1']
    #allocation9 [shape = 'u8[1048576]{0}', space=vmem, size = 0x100000, scoped, tag = 'input window, operand 3, single buffered']
    #allocation10 [shape = 'u8[1048576]{0}', space=vmem, size = 0x100000, scoped, tag = 'output window, operand 0, single buffered']
    %13 = vsyncpa [#allocation5], 0
    %14 = vsyncpa [#allocation8], 0
    %15 = vsyncpa [#allocation6], 0
    // Predicated region
    $region2: #{tpu_custom_call.1} parent=1 // pred_check
      _
    $region3: #{tpu_custom_call.1} parent=1 // pred_check_branch
      %17 = sbr.rel (0) target = $region5
    $region4: #{tpu_custom_call.1} parent=1 // pred_region
      %s19 = ssub.s32 32768, 32768
      %20 = vsyncadd [#allocation5], %s19
      %s21 = sshll.u32 [#allocation4], 4
      %s22 = int_to_ptr.vmem [resolvable:$true] %s21
      %27 = dma.hbm_to_vmem [thread:$0]  %s1, 32768, %s22, [#allocation5], 2048, 2048, 128
    $region5: #{tpu_custom_call.1} parent=1 // pred_fallthru
      _
    // Predicated region
    $region6: #{tpu_custom_call.1} parent=1 // pred_check
      _
    $region7: #{tpu_custom_call.1} parent=1 // pred_check_branch
      %29 = sbr.rel (0) target = $region9
    $region8: #{tpu_custom_call.1} parent=1 // pred_region
      %s31 = ssub.s32 32768, 32768
      %32 = vsyncadd [#allocation8], %s31
      %s33 = sshll.u32 [#allocation7], 4
      %s34 = int_to_ptr.vmem [resolvable:$true] %s33
      %39 = dma.hbm_to_vmem [thread:$0]  %s2, 32768, %s34, [#allocation8], 2048, 2048, 128
    $region9: #{tpu_custom_call.1} parent=1 // pred_fallthru
      _
    // Predicated region
    $region10: #{tpu_custom_call.1} parent=1 // pred_check
      _
    $region11: #{tpu_custom_call.1} parent=1 // pred_check_branch
      %41 = sbr.rel (0) target = $region13
    $region12: #{tpu_custom_call.1} parent=1 // pred_region
      %s43 = ssub.s32 32768, 32768
      %44 = vsyncadd [#allocation8], %s43
      %s45 = sshll.u32 [#allocation9], 4
      %s46 = int_to_ptr.vmem [resolvable:$true] %s45
      %51 = dma.hbm_to_vmem [thread:$0]  %s3, 32768, %s46, [#allocation8], 2048, 2048, 128
    $region13: #{tpu_custom_call.1} parent=1 // pred_fallthru
      _
    // Predicated region
    $region14: #{tpu_custom_call.1} parent=1 // pred_check
      _
    $region15: #{tpu_custom_call.1} parent=1 // pred_check_branch
      %53 = sbr.rel (0) target = $region17
    $region16: #{tpu_custom_call.1} parent=1 // pred_region
      %54 = dma.done [#allocation5], 32768
    $region17: #{tpu_custom_call.1} parent=1 // pred_fallthru
      _
    // Predicated region
    $region18: #{tpu_custom_call.1} parent=1 // pred_check
      _
    $region19: #{tpu_custom_call.1} parent=1 // pred_check_branch
      %56 = sbr.rel (0) target = $region21
    $region20: #{tpu_custom_call.1} parent=1 // pred_region
      %57 = dma.done [#allocation8], 32768
    $region21: #{tpu_custom_call.1} parent=1 // pred_fallthru
      _
    // Predicated region
    $region22: #{tpu_custom_call.1} parent=1 // pred_check
      _
    $region23: #{tpu_custom_call.1} parent=1 // pred_check_branch
      %59 = sbr.rel (0) target = $region25
    $region24: #{tpu_custom_call.1} parent=1 // pred_region
      %60 = dma.done [#allocation8], 32768
    $region25: #{tpu_custom_call.1} parent=1 // pred_fallthru
      _
    %s61 = sld [smem:[#allocation3]]
    %v62 = vld [vmem:[#allocation4] sm:$0xff]
    %v63 = vld [vmem:[#allocation4 + $0x8] sm:$0xff]
    %v64 = vld [vmem:[#allocation4 + $0x10] sm:$0xff]
    %v65 = vld [vmem:[#allocation4 + $0x18] sm:$0xff]
    %v66 = vld [vmem:[#allocation4 + $0x20] sm:$0xff]
    %v67 = vld [vmem:[#allocation4 + $0x28] sm:$0xff]
    %v68 = vld [vmem:[#allocation4 + $0x30] sm:$0xff]
    %v69 = vld [vmem:[#allocation4 + $0x38] sm:$0xff]
    %v70 = vld [vmem:[#allocation4 + $0x40] sm:$0xff]
    %v71 = vld [vmem:[#allocation4 + $0x48] sm:$0xff]
    %v72 = vld [vmem:[#allocation4 + $0x50] sm:$0xff]
    %v73 = vld [vmem:[#allocation4 + $0x58] sm:$0xff]
    %v74 = vld [vmem:[#allocation4 + $0x60] sm:$0xff]
    %v75 = vld [vmem:[#allocation4 + $0x68] sm:$0xff]
    %v76 = vld [vmem:[#allocation4 + $0x70] sm:$0xff]
    %v77 = vld [vmem:[#allocation4 + $0x78] sm:$0xff]
    %v78 = vld [vmem:[#allocation4 + $0x80] sm:$0xff]
    %v79 = vld [vmem:[#allocation4 + $0x88] sm:$0xff]
    %v80 = vld [vmem:[#allocation4 + $0x90] sm:$0xff]
    %v81 = vld [vmem:[#allocation4 + $0x98] sm:$0xff]
    %v82 = vld [vmem:[#allocation4 + $0xa0] sm:$0xff]
    %v83 = vld [vmem:[#allocation4 + $0xa8] sm:$0xff]
    %v84 = vld [vmem:[#allocation4 + $0xb0] sm:$0xff]
    %v85 = vld [vmem:[#allocation4 + $0xb8] sm:$0xff]
    %v86 = vld [vmem:[#allocation4 + $0xc0] sm:$0xff]
    %v87 = vld [vmem:[#allocation4 + $0xc8] sm:$0xff]
    %v88 = vld [vmem:[#allocation4 + $0xd0] sm:$0xff]
    %v89 = vld [vmem:[#allocation4 + $0xd8] sm:$0xff]
    %v90 = vld [vmem:[#allocation4 + $0xe0] sm:$0xff]
    %v91 = vld [vmem:[#allocation4 + $0xe8] sm:$0xff]
    %v92 = vld [vmem:[#allocation4 + $0xf0] sm:$0xff]
    %v93 = vld [vmem:[#allocation4 + $0xf8] sm:$0xff]
    %v94 = vld [vmem:[#allocation4 + $0x100] sm:$0xff]
    %v95 = vld [vmem:[#allocation4 + $0x108] sm:$0xff]
    %v96 = vld [vmem:[#allocation4 + $0x110] sm:$0xff]
    %v97 = vld [vmem:[#allocation4 + $0x118] sm:$0xff]
    %v98 = vld [vmem:[#allocation4 + $0x120] sm:$0xff]
    %v99 = vld [vmem:[#allocation4 + $0x128] sm:$0xff]
    %v100 = vld [vmem:[#allocation4 + $0x130] sm:$0xff]
    %v101 = vld [vmem:[#allocation4 + $0x138] sm:$0xff]
    %v102 = vld [vmem:[#allocation4 + $0x140] sm:$0xff]
    %v103 = vld [vmem:[#allocation4 + $0x148] sm:$0xff]
    %v104 = vld [vmem:[#allocation4 + $0x150] sm:$0xff]
    %v105 = vld [vmem:[#allocation4 + $0x158] sm:$0xff]
    %v106 = vld [vmem:[#allocation4 + $0x160] sm:$0xff]
    %v107 = vld [vmem:[#allocation4 + $0x168] sm:$0xff]
    %v108 = vld [vmem:[#allocation4 + $0x170] sm:$0xff]
    %v109 = vld [vmem:[#allocation4 + $0x178] sm:$0xff]
    %v110 = vld [vmem:[#allocation4 + $0x180] sm:$0xff]
    %v111 = vld [vmem:[#allocation4 + $0x188] sm:$0xff]
    %v112 = vld [vmem:[#allocation4 + $0x190] sm:$0xff]
    %v113 = vld [vmem:[#allocation4 + $0x198] sm:$0xff]
    %v114 = vld [vmem:[#allocation4 + $0x1a0] sm:$0xff]
    %v115 = vld [vmem:[#allocation4 + $0x1a8] sm:$0xff]
    %v116 = vld [vmem:[#allocation4 + $0x1b0] sm:$0xff]
    %v117 = vld [vmem:[#allocation4 + $0x1b8] sm:$0xff]
    %v118 = vld [vmem:[#allocation4 + $0x1c0] sm:$0xff]
    %v119 = vld [vmem:[#allocation4 + $0x1c8] sm:$0xff]
    %v120 = vld [vmem:[#allocation4 + $0x1d0] sm:$0xff]
    %v121 = vld [vmem:[#allocation4 + $0x1d8] sm:$0xff]
    %v122 = vld [vmem:[#allocation4 + $0x1e0] sm:$0xff]
    %v123 = vld [vmem:[#allocation4 + $0x1e8] sm:$0xff]
    %v124 = vld [vmem:[#allocation4 + $0x1f0] sm:$0xff]
    %v125 = vld [vmem:[#allocation4 + $0x1f8] sm:$0xff]
    %v126 = vld [vmem:[#allocation4 + $0x200] sm:$0xff]
    %v127 = vld [vmem:[#allocation4 + $0x208] sm:$0xff]
    %v128 = vld [vmem:[#allocation4 + $0x210] sm:$0xff]
    %v129 = vld [vmem:[#allocation4 + $0x218] sm:$0xff]
    %v130 = vld [vmem:[#allocation4 + $0x220] sm:$0xff]
    %v131 = vld [vmem:[#allocation4 + $0x228] sm:$0xff]
    %v132 = vld [vmem:[#allocation4 + $0x230] sm:$0xff]
    %v133 = vld [vmem:[#allocation4 + $0x238] sm:$0xff]
    %v134 = vld [vmem:[#allocation4 + $0x240] sm:$0xff]
    %v135 = vld [vmem:[#allocation4 + $0x248] sm:$0xff]
    %v136 = vld [vmem:[#allocation4 + $0x250] sm:$0xff]
    %v137 = vld [vmem:[#allocation4 + $0x258] sm:$0xff]
    %v138 = vld [vmem:[#allocation4 + $0x260] sm:$0xff]
    %v139 = vld [vmem:[#allocation4 + $0x268] sm:$0xff]
    %v140 = vld [vmem:[#allocation4 + $0x270] sm:$0xff]
    %v141 = vld [vmem:[#allocation4 + $0x278] sm:$0xff]
    %v142 = vld [vmem:[#allocation4 + $0x280] sm:$0xff]
    %v143 = vld [vmem:[#allocation4 + $0x288] sm:$0xff]
    %v144 = vld [vmem:[#allocation4 + $0x290] sm:$0xff]
    %v145 = vld [vmem:[#allocation4 + $0x298] sm:$0xff]
    %v146 = vld [vmem:[#allocation4 + $0x2a0] sm:$0xff]
    %v147 = vld [vmem:[#allocation4 + $0x2a8] sm:$0xff]
    %v148 = vld [vmem:[#allocation4 + $0x2b0] sm:$0xff]
    %v149 = vld [vmem:[#allocation4 + $0x2b8] sm:$0xff]
    %v150 = vld [vmem:[#allocation4 + $0x2c0] sm:$0xff]
    %v151 = vld [vmem:[#allocation4 + $0x2c8] sm:$0xff]
    %v152 = vld [vmem:[#allocation4 + $0x2d0] sm:$0xff]
    %v153 = vld [vmem:[#allocation4 + $0x2d8] sm:$0xff]
    %v154 = vld [vmem:[#allocation4 + $0x2e0] sm:$0xff]
    %v155 = vld [vmem:[#allocation4 + $0x2e8] sm:$0xff]
    %v156 = vld [vmem:[#allocation4 + $0x2f0] sm:$0xff]
    %v157 = vld [vmem:[#allocation4 + $0x2f8] sm:$0xff]
    %v158 = vld [vmem:[#allocation4 + $0x300] sm:$0xff]
    %v159 = vld [vmem:[#allocation4 + $0x308] sm:$0xff]
    %v160 = vld [vmem:[#allocation4 + $0x310] sm:$0xff]
    %v161 = vld [vmem:[#allocation4 + $0x318] sm:$0xff]
    %v162 = vld [vmem:[#allocation4 + $0x320] sm:$0xff]
    %v163 = vld [vmem:[#allocation4 + $0x328] sm:$0xff]
    %v164 = vld [vmem:[#allocation4 + $0x330] sm:$0xff]
    %v165 = vld [vmem:[#allocation4 + $0x338] sm:$0xff]
    %v166 = vld [vmem:[#allocation4 + $0x340] sm:$0xff]
    %v167 = vld [vmem:[#allocation4 + $0x348] sm:$0xff]
    %v168 = vld [vmem:[#allocation4 + $0x350] sm:$0xff]
    %v169 = vld [vmem:[#allocation4 + $0x358] sm:$0xff]
    %v170 = vld [vmem:[#allocation4 + $0x360] sm:$0xff]
    %v171 = vld [vmem:[#allocation4 + $0x368] sm:$0xff]
    %v172 = vld [vmem:[#allocation4 + $0x370] sm:$0xff]
    %v173 = vld [vmem:[#allocation4 + $0x378] sm:$0xff]
    %v174 = vld [vmem:[#allocation4 + $0x380] sm:$0xff]
    %v175 = vld [vmem:[#allocation4 + $0x388] sm:$0xff]
    %v176 = vld [vmem:[#allocation4 + $0x390] sm:$0xff]
    %v177 = vld [vmem:[#allocation4 + $0x398] sm:$0xff]
    %v178 = vld [vmem:[#allocation4 + $0x3a0] sm:$0xff]
    %v179 = vld [vmem:[#allocation4 + $0x3a8] sm:$0xff]
    %v180 = vld [vmem:[#allocation4 + $0x3b0] sm:$0xff]
    %v181 = vld [vmem:[#allocation4 + $0x3b8] sm:$0xff]
    %v182 = vld [vmem:[#allocation4 + $0x3c0] sm:$0xff]
    %v183 = vld [vmem:[#allocation4 + $0x3c8] sm:$0xff]
    %v184 = vld [vmem:[#allocation4 + $0x3d0] sm:$0xff]
    %v185 = vld [vmem:[#allocation4 + $0x3d8] sm:$0xff]
    %v186 = vld [vmem:[#allocation4 + $0x3e0] sm:$0xff]
    %v187 = vld [vmem:[#allocation4 + $0x3e8] sm:$0xff]
    %v188 = vld [vmem:[#allocation4 + $0x3f0] sm:$0xff]
    %v189 = vld [vmem:[#allocation4 + $0x3f8] sm:$0xff]
    %v190 = vld [vmem:[#allocation4 + $0x400] sm:$0xff]
    %v191 = vld [vmem:[#allocation4 + $0x408] sm:$0xff]
    %v192 = vld [vmem:[#allocation4 + $0x410] sm:$0xff]
    %v193 = vld [vmem:[#allocation4 + $0x418] sm:$0xff]
    %v194 = vld [vmem:[#allocation4 + $0x420] sm:$0xff]
    %v195 = vld [vmem:[#allocation4 + $0x428] sm:$0xff]
    %v196 = vld [vmem:[#allocation4 + $0x430] sm:$0xff]
    %v197 = vld [vmem:[#allocation4 + $0x438] sm:$0xff]
    %v198 = vld [vmem:[#allocation4 + $0x440] sm:$0xff]
    %v199 = vld [vmem:[#allocation4 + $0x448] sm:$0xff]
    %v200 = vld [vmem:[#allocation4 + $0x450] sm:$0xff]
    %v201 = vld [vmem:[#allocation4 + $0x458] sm:$0xff]
    %v202 = vld [vmem:[#allocation4 + $0x460] sm:$0xff]
    %v203 = vld [vmem:[#allocation4 + $0x468] sm:$0xff]
    %v204 = vld [vmem:[#allocation4 + $0x470] sm:$0xff]
    %v205 = vld [vmem:[#allocation4 + $0x478] sm:$0xff]
    %v206 = vld [vmem:[#allocation4 + $0x480] sm:$0xff]
    %v207 = vld [vmem:[#allocation4 + $0x488] sm:$0xff]
    %v208 = vld [vmem:[#allocation4 + $0x490] sm:$0xff]
    %v209 = vld [vmem:[#allocation4 + $0x498] sm:$0xff]
    %v210 = vld [vmem:[#allocation4 + $0x4a0] sm:$0xff]
    %v211 = vld [vmem:[#allocation4 + $0x4a8] sm:$0xff]
    %v212 = vld [vmem:[#allocation4 + $0x4b0] sm:$0xff]
    %v213 = vld [vmem:[#allocation4 + $0x4b8] sm:$0xff]
    %v214 = vld [vmem:[#allocation4 + $0x4c0] sm:$0xff]
    %v215 = vld [vmem:[#allocation4 + $0x4c8] sm:$0xff]
    %v216 = vld [vmem:[#allocation4 + $0x4d0] sm:$0xff]
    %v217 = vld [vmem:[#allocation4 + $0x4d8] sm:$0xff]
    %v218 = vld [vmem:[#allocation4 + $0x4e0] sm:$0xff]
    %v219 = vld [vmem:[#allocation4 + $0x4e8] sm:$0xff]
    %v220 = vld [vmem:[#allocation4 + $0x4f0] sm:$0xff]
    %v221 = vld [vmem:[#allocation4 + $0x4f8] sm:$0xff]
    %v222 = vld [vmem:[#allocation4 + $0x500] sm:$0xff]
    %v223 = vld [vmem:[#allocation4 + $0x508] sm:$0xff]
    %v224 = vld [vmem:[#allocation4 + $0x510] sm:$0xff]
    %v225 = vld [vmem:[#allocation4 + $0x518] sm:$0xff]
    %v226 = vld [vmem:[#allocation4 + $0x520] sm:$0xff]
    %v227 = vld [vmem:[#allocation4 + $0x528] sm:$0xff]
    %v228 = vld [vmem:[#allocation4 + $0x530] sm:$0xff]
    %v229 = vld [vmem:[#allocation4 + $0x538] sm:$0xff]
    %v230 = vld [vmem:[#allocation4 + $0x540] sm:$0xff]
    %v231 = vld [vmem:[#allocation4 + $0x548] sm:$0xff]
    %v232 = vld [vmem:[#allocation4 + $0x550] sm:$0xff]
    %v233 = vld [vmem:[#allocation4 + $0x558] sm:$0xff]
    %v234 = vld [vmem:[#allocation4 + $0x560] sm:$0xff]
    %v235 = vld [vmem:[#allocation4 + $0x568] sm:$0xff]
    %v236 = vld [vmem:[#allocation4 + $0x570] sm:$0xff]
    %v237 = vld [vmem:[#allocation4 + $0x578] sm:$0xff]
    %v238 = vld [vmem:[#allocation4 + $0x580] sm:$0xff]
    %v239 = vld [vmem:[#allocation4 + $0x588] sm:$0xff]
    %v240 = vld [vmem:[#allocation4 + $0x590] sm:$0xff]
    %v241 = vld [vmem:[#allocation4 + $0x598] sm:$0xff]
    %v242 = vld [vmem:[#allocation4 + $0x5a0] sm:$0xff]
    %v243 = vld [vmem:[#allocation4 + $0x5a8] sm:$0xff]
    %v244 = vld [vmem:[#allocation4 + $0x5b0] sm:$0xff]
    %v245 = vld [vmem:[#allocation4 + $0x5b8] sm:$0xff]
    %v246 = vld [vmem:[#allocation4 + $0x5c0] sm:$0xff]
    %v247 = vld [vmem:[#allocation4 + $0x5c8] sm:$0xff]
    %v248 = vld [vmem:[#allocation4 + $0x5d0] sm:$0xff]
    %v249 = vld [vmem:[#allocation4 + $0x5d8] sm:$0xff]
    %v250 = vld [vmem:[#allocation4 + $0x5e0] sm:$0xff]
    %v251 = vld [vmem:[#allocation4 + $0x5e8] sm:$0xff]
    %v252 = vld [vmem:[#allocation4 + $0x5f0] sm:$0xff]
    %v253 = vld [vmem:[#allocation4 + $0x5f8] sm:$0xff]
    %v254 = vld [vmem:[#allocation4 + $0x600] sm:$0xff]
    %v255 = vld [vmem:[#allocation4 + $0x608] sm:$0xff]
    %v256 = vld [vmem:[#allocation4 + $0x610] sm:$0xff]
    %v257 = vld [vmem:[#allocation4 + $0x618] sm:$0xff]
    %v258 = vld [vmem:[#allocation4 + $0x620] sm:$0xff]
    %v259 = vld [vmem:[#allocation4 + $0x628] sm:$0xff]
    %v260 = vld [vmem:[#allocation4 + $0x630] sm:$0xff]
    %v261 = vld [vmem:[#allocation4 + $0x638] sm:$0xff]
    %v262 = vld [vmem:[#allocation4 + $0x640] sm:$0xff]
    %v263 = vld [vmem:[#allocation4 + $0x648] sm:$0xff]
    %v264 = vld [vmem:[#allocation4 + $0x650] sm:$0xff]
    %v265 = vld [vmem:[#allocation4 + $0x658] sm:$0xff]
    %v266 = vld [vmem:[#allocation4 + $0x660] sm:$0xff]
    %v267 = vld [vmem:[#allocation4 + $0x668] sm:$0xff]
    %v268 = vld [vmem:[#allocation4 + $0x670] sm:$0xff]
    %v269 = vld [vmem:[#allocation4 + $0x678] sm:$0xff]
    %v270 = vld [vmem:[#allocation4 + $0x680] sm:$0xff]
    %v271 = vld [vmem:[#allocation4 + $0x688] sm:$0xff]
    %v272 = vld [vmem:[#allocation4 + $0x690] sm:$0xff]
    %v273 = vld [vmem:[#allocation4 + $0x698] sm:$0xff]
    %v274 = vld [vmem:[#allocation4 + $0x6a0] sm:$0xff]
    %v275 = vld [vmem:[#allocation4 + $0x6a8] sm:$0xff]
    %v276 = vld [vmem:[#allocation4 + $0x6b0] sm:$0xff]
    %v277 = vld [vmem:[#allocation4 + $0x6b8] sm:$0xff]
    %v278 = vld [vmem:[#allocation4 + $0x6c0] sm:$0xff]
    %v279 = vld [vmem:[#allocation4 + $0x6c8] sm:$0xff]
    %v280 = vld [vmem:[#allocation4 + $0x6d0] sm:$0xff]
    %v281 = vld [vmem:[#allocation4 + $0x6d8] sm:$0xff]
    %v282 = vld [vmem:[#allocation4 + $0x6e0] sm:$0xff]
    %v283 = vld [vmem:[#allocation4 + $0x6e8] sm:$0xff]
    %v284 = vld [vmem:[#allocation4 + $0x6f0] sm:$0xff]
    %v285 = vld [vmem:[#allocation4 + $0x6f8] sm:$0xff]
    %v286 = vld [vmem:[#allocation4 + $0x700] sm:$0xff]
    %v287 = vld [vmem:[#allocation4 + $0x708] sm:$0xff]
    %v288 = vld [vmem:[#allocation4 + $0x710] sm:$0xff]
    %v289 = vld [vmem:[#allocation4 + $0x718] sm:$0xff]
    %v290 = vld [vmem:[#allocation4 + $0x720] sm:$0xff]
    %v291 = vld [vmem:[#allocation4 + $0x728] sm:$0xff]
    %v292 = vld [vmem:[#allocation4 + $0x730] sm:$0xff]
    %v293 = vld [vmem:[#allocation4 + $0x738] sm:$0xff]
    %v294 = vld [vmem:[#allocation4 + $0x740] sm:$0xff]
    %v295 = vld [vmem:[#allocation4 + $0x748] sm:$0xff]
    %v296 = vld [vmem:[#allocation4 + $0x750] sm:$0xff]
    %v297 = vld [vmem:[#allocation4 + $0x758] sm:$0xff]
    %v298 = vld [vmem:[#allocation4 + $0x760] sm:$0xff]
    %v299 = vld [vmem:[#allocation4 + $0x768] sm:$0xff]
    %v300 = vld [vmem:[#allocation4 + $0x770] sm:$0xff]
    %v301 = vld [vmem:[#allocation4 + $0x778] sm:$0xff]
    %v302 = vld [vmem:[#allocation4 + $0x780] sm:$0xff]
    %v303 = vld [vmem:[#allocation4 + $0x788] sm:$0xff]
    %v304 = vld [vmem:[#allocation4 + $0x790] sm:$0xff]
    %v305 = vld [vmem:[#allocation4 + $0x798] sm:$0xff]
    %v306 = vld [vmem:[#allocation4 + $0x7a0] sm:$0xff]
    %v307 = vld [vmem:[#allocation4 + $0x7a8] sm:$0xff]
    %v308 = vld [vmem:[#allocation4 + $0x7b0] sm:$0xff]
    %v309 = vld [vmem:[#allocation4 + $0x7b8] sm:$0xff]
    %v310 = vld [vmem:[#allocation4 + $0x7c0] sm:$0xff]
    %v311 = vld [vmem:[#allocation4 + $0x7c8] sm:$0xff]
    %v312 = vld [vmem:[#allocation4 + $0x7d0] sm:$0xff]
    %v313 = vld [vmem:[#allocation4 + $0x7d8] sm:$0xff]
    %v314 = vld [vmem:[#allocation4 + $0x7e0] sm:$0xff]
    %v315 = vld [vmem:[#allocation4 + $0x7e8] sm:$0xff]
    %v316 = vld [vmem:[#allocation4 + $0x7f0] sm:$0xff]
    %v317 = vld [vmem:[#allocation4 + $0x7f8] sm:$0xff]
    %v318 = vstv %s61
    %v319 = vmul.f32 %v318, %v62
    %v320 = vmul.f32 %v318, %v63
    %v321 = vmul.f32 %v318, %v64
    %v322 = vmul.f32 %v318, %v65
    %v323 = vmul.f32 %v318, %v66
    %v324 = vmul.f32 %v318, %v67
    %v325 = vmul.f32 %v318, %v68
    %v326 = vmul.f32 %v318, %v69
    %v327 = vmul.f32 %v318, %v70
    %v328 = vmul.f32 %v318, %v71
    %v329 = vmul.f32 %v318, %v72
    %v330 = vmul.f32 %v318, %v73
    %v331 = vmul.f32 %v318, %v74
    %v332 = vmul.f32 %v318, %v75
    %v333 = vmul.f32 %v318, %v76
    %v334 = vmul.f32 %v318, %v77
    %v335 = vmul.f32 %v318, %v78
    %v336 = vmul.f32 %v318, %v79
    %v337 = vmul.f32 %v318, %v80
    %v338 = vmul.f32 %v318, %v81
    %v339 = vmul.f32 %v318, %v82
    %v340 = vmul.f32 %v318, %v83
    %v341 = vmul.f32 %v318, %v84
    %v342 = vmul.f32 %v318, %v85
    %v343 = vmul.f32 %v318, %v86
    %v344 = vmul.f32 %v318, %v87
    %v345 = vmul.f32 %v318, %v88
    %v346 = vmul.f32 %v318, %v89
    %v347 = vmul.f32 %v318, %v90
    %v348 = vmul.f32 %v318, %v91
    %v349 = vmul.f32 %v318, %v92
    %v350 = vmul.f32 %v318, %v93
    %v351 = vmul.f32 %v318, %v94
    %v352 = vmul.f32 %v318, %v95
    %v353 = vmul.f32 %v318, %v96
    %v354 = vmul.f32 %v318, %v97
    %v355 = vmul.f32 %v318, %v98
    %v356 = vmul.f32 %v318, %v99
    %v357 = vmul.f32 %v318, %v100
    %v358 = vmul.f32 %v318, %v101
    %v359 = vmul.f32 %v318, %v102
    %v360 = vmul.f32 %v318, %v103
    %v361 = vmul.f32 %v318, %v104
    %v362 = vmul.f32 %v318, %v105
    %v363 = vmul.f32 %v318, %v106
    %v364 = vmul.f32 %v318, %v107
    %v365 = vmul.f32 %v318, %v108
    %v366 = vmul.f32 %v318, %v109
    %v367 = vmul.f32 %v318, %v110
    %v368 = vmul.f32 %v318, %v111
    %v369 = vmul.f32 %v318, %v112
    %v370 = vmul.f32 %v318, %v113
    %v371 = vmul.f32 %v318, %v114
    %v372 = vmul.f32 %v318, %v115
    %v373 = vmul.f32 %v318, %v116
    %v374 = vmul.f32 %v318, %v117
    %v375 = vmul.f32 %v318, %v118
    %v376 = vmul.f32 %v318, %v119
    %v377 = vmul.f32 %v318, %v120
    %v378 = vmul.f32 %v318, %v121
    %v379 = vmul.f32 %v318, %v122
    %v380 = vmul.f32 %v318, %v123
    %v381 = vmul.f32 %v318, %v124
    %v382 = vmul.f32 %v318, %v125
    %v383 = vmul.f32 %v318, %v126
    %v384 = vmul.f32 %v318, %v127
    %v385 = vmul.f32 %v318, %v128
    %v386 = vmul.f32 %v318, %v129
    %v387 = vmul.f32 %v318, %v130
    %v388 = vmul.f32 %v318, %v131
    %v389 = vmul.f32 %v318, %v132
    %v390 = vmul.f32 %v318, %v133
    %v391 = vmul.f32 %v318, %v134
    %v392 = vmul.f32 %v318, %v135
    %v393 = vmul.f32 %v318, %v136
    %v394 = vmul.f32 %v318, %v137
    %v395 = vmul.f32 %v318, %v138
    %v396 = vmul.f32 %v318, %v139
    %v397 = vmul.f32 %v318, %v140
    %v398 = vmul.f32 %v318, %v141
    %v399 = vmul.f32 %v318, %v142
    %v400 = vmul.f32 %v318, %v143
    %v401 = vmul.f32 %v318, %v144
    %v402 = vmul.f32 %v318, %v145
    %v403 = vmul.f32 %v318, %v146
    %v404 = vmul.f32 %v318, %v147
    %v405 = vmul.f32 %v318, %v148
    %v406 = vmul.f32 %v318, %v149
    %v407 = vmul.f32 %v318, %v150
    %v408 = vmul.f32 %v318, %v151
    %v409 = vmul.f32 %v318, %v152
    %v410 = vmul.f32 %v318, %v153
    %v411 = vmul.f32 %v318, %v154
    %v412 = vmul.f32 %v318, %v155
    %v413 = vmul.f32 %v318, %v156
    %v414 = vmul.f32 %v318, %v157
    %v415 = vmul.f32 %v318, %v158
    %v416 = vmul.f32 %v318, %v159
    %v417 = vmul.f32 %v318, %v160
    %v418 = vmul.f32 %v318, %v161
    %v419 = vmul.f32 %v318, %v162
    %v420 = vmul.f32 %v318, %v163
    %v421 = vmul.f32 %v318, %v164
    %v422 = vmul.f32 %v318, %v165
    %v423 = vmul.f32 %v318, %v166
    %v424 = vmul.f32 %v318, %v167
    %v425 = vmul.f32 %v318, %v168
    %v426 = vmul.f32 %v318, %v169
    %v427 = vmul.f32 %v318, %v170
    %v428 = vmul.f32 %v318, %v171
    %v429 = vmul.f32 %v318, %v172
    %v430 = vmul.f32 %v318, %v173
    %v431 = vmul.f32 %v318, %v174
    %v432 = vmul.f32 %v318, %v175
    %v433 = vmul.f32 %v318, %v176
    %v434 = vmul.f32 %v318, %v177
    %v435 = vmul.f32 %v318, %v178
    %v436 = vmul.f32 %v318, %v179
    %v437 = vmul.f32 %v318, %v180
    %v438 = vmul.f32 %v318, %v181
    %v439 = vmul.f32 %v318, %v182
    %v440 = vmul.f32 %v318, %v183
    %v441 = vmul.f32 %v318, %v184
    %v442 = vmul.f32 %v318, %v185
    %v443 = vmul.f32 %v318, %v186
    %v444 = vmul.f32 %v318, %v187
    %v445 = vmul.f32 %v318, %v188
    %v446 = vmul.f32 %v318, %v189
    %v447 = vmul.f32 %v318, %v190
    %v448 = vmul.f32 %v318, %v191
    %v449 = vmul.f32 %v318, %v192
    %v450 = vmul.f32 %v318, %v193
    %v451 = vmul.f32 %v318, %v194
    %v452 = vmul.f32 %v318, %v195
    %v453 = vmul.f32 %v318, %v196
    %v454 = vmul.f32 %v318, %v197
    %v455 = vmul.f32 %v318, %v198
    %v456 = vmul.f32 %v318, %v199
    %v457 = vmul.f32 %v318, %v200
    %v458 = vmul.f32 %v318, %v201
    %v459 = vmul.f32 %v318, %v202
    %v460 = vmul.f32 %v318, %v203
    %v461 = vmul.f32 %v318, %v204
    %v462 = vmul.f32 %v318, %v205
    %v463 = vmul.f32 %v318, %v206
    %v464 = vmul.f32 %v318, %v207
    %v465 = vmul.f32 %v318, %v208
    %v466 = vmul.f32 %v318, %v209
    %v467 = vmul.f32 %v318, %v210
    %v468 = vmul.f32 %v318, %v211
    %v469 = vmul.f32 %v318, %v212
    %v470 = vmul.f32 %v318, %v213
    %v471 = vmul.f32 %v318, %v214
    %v472 = vmul.f32 %v318, %v215
    %v473 = vmul.f32 %v318, %v216
    %v474 = vmul.f32 %v318, %v217
    %v475 = vmul.f32 %v318, %v218
    %v476 = vmul.f32 %v318, %v219
    %v477 = vmul.f32 %v318, %v220
    %v478 = vmul.f32 %v318, %v221
    %v479 = vmul.f32 %v318, %v222
    %v480 = vmul.f32 %v318, %v223
    %v481 = vmul.f32 %v318, %v224
    %v482 = vmul.f32 %v318, %v225
    %v483 = vmul.f32 %v318, %v226
    %v484 = vmul.f32 %v318, %v227
    %v485 = vmul.f32 %v318, %v228
    %v486 = vmul.f32 %v318, %v229
    %v487 = vmul.f32 %v318, %v230
    %v488 = vmul.f32 %v318, %v231
    %v489 = vmul.f32 %v318, %v232
    %v490 = vmul.f32 %v318, %v233
    %v491 = vmul.f32 %v318, %v234
    %v492 = vmul.f32 %v318, %v235
    %v493 = vmul.f32 %v318, %v236
    %v494 = vmul.f32 %v318, %v237
    %v495 = vmul.f32 %v318, %v238
    %v496 = vmul.f32 %v318, %v239
    %v497 = vmul.f32 %v318, %v240
    %v498 = vmul.f32 %v318, %v241
    %v499 = vmul.f32 %v318, %v242
    %v500 = vmul.f32 %v318, %v243
    %v501 = vmul.f32 %v318, %v244
    %v502 = vmul.f32 %v318, %v245
    %v503 = vmul.f32 %v318, %v246
    %v504 = vmul.f32 %v318, %v247
    %v505 = vmul.f32 %v318, %v248
    %v506 = vmul.f32 %v318, %v249
    %v507 = vmul.f32 %v318, %v250
    %v508 = vmul.f32 %v318, %v251
    %v509 = vmul.f32 %v318, %v252
    %v510 = vmul.f32 %v318, %v253
    %v511 = vmul.f32 %v318, %v254
    %v512 = vmul.f32 %v318, %v255
    %v513 = vmul.f32 %v318, %v256
    %v514 = vmul.f32 %v318, %v257
    %v515 = vmul.f32 %v318, %v258
    %v516 = vmul.f32 %v318, %v259
    %v517 = vmul.f32 %v318, %v260
    %v518 = vmul.f32 %v318, %v261
    %v519 = vmul.f32 %v318, %v262
    %v520 = vmul.f32 %v318, %v263
    %v521 = vmul.f32 %v318, %v264
    %v522 = vmul.f32 %v318, %v265
    %v523 = vmul.f32 %v318, %v266
    %v524 = vmul.f32 %v318, %v267
    %v525 = vmul.f32 %v318, %v268
    %v526 = vmul.f32 %v318, %v269
    %v527 = vmul.f32 %v318, %v270
    %v528 = vmul.f32 %v318, %v271
    %v529 = vmul.f32 %v318, %v272
    %v530 = vmul.f32 %v318, %v273
    %v531 = vmul.f32 %v318, %v274
    %v532 = vmul.f32 %v318, %v275
    %v533 = vmul.f32 %v318, %v276
    %v534 = vmul.f32 %v318, %v277
    %v535 = vmul.f32 %v318, %v278
    %v536 = vmul.f32 %v318, %v279
    %v537 = vmul.f32 %v318, %v280
    %v538 = vmul.f32 %v318, %v281
    %v539 = vmul.f32 %v318, %v282
    %v540 = vmul.f32 %v318, %v283
    %v541 = vmul.f32 %v318, %v284
    %v542 = vmul.f32 %v318, %v285
    %v543 = vmul.f32 %v318, %v286
    %v544 = vmul.f32 %v318, %v287
    %v545 = vmul.f32 %v318, %v288
    %v546 = vmul.f32 %v318, %v289
    %v547 = vmul.f32 %v318, %v290
    %v548 = vmul.f32 %v318, %v291
    %v549 = vmul.f32 %v318, %v292
    %v550 = vmul.f32 %v318, %v293
    %v551 = vmul.f32 %v318, %v294
    %v552 = vmul.f32 %v318, %v295
    %v553 = vmul.f32 %v318, %v296
    %v554 = vmul.f32 %v318, %v297
    %v555 = vmul.f32 %v318, %v298
    %v556 = vmul.f32 %v318, %v299
    %v557 = vmul.f32 %v318, %v300
    %v558 = vmul.f32 %v318, %v301
    %v559 = vmul.f32 %v318, %v302
    %v560 = vmul.f32 %v318, %v303
    %v561 = vmul.f32 %v318, %v304
    %v562 = vmul.f32 %v318, %v305
    %v563 = vmul.f32 %v318, %v306
    %v564 = vmul.f32 %v318, %v307
    %v565 = vmul.f32 %v318, %v308
    %v566 = vmul.f32 %v318, %v309
    %v567 = vmul.f32 %v318, %v310
    %v568 = vmul.f32 %v318, %v311
    %v569 = vmul.f32 %v318, %v312
    %v570 = vmul.f32 %v318, %v313
    %v571 = vmul.f32 %v318, %v314
    %v572 = vmul.f32 %v318, %v315
    %v573 = vmul.f32 %v318, %v316
    %v574 = vmul.f32 %v318, %v317
    %s575 = sld [smem:[#allocation3 + $0x1]]
    %v576 = vld [vmem:[#allocation7] sm:$0xff]
    %v577 = vld [vmem:[#allocation7 + $0x8] sm:$0xff]
    %v578 = vld [vmem:[#allocation7 + $0x10] sm:$0xff]
    %v579 = vld [vmem:[#allocation7 + $0x18] sm:$0xff]
    %v580 = vld [vmem:[#allocation7 + $0x20] sm:$0xff]
    %v581 = vld [vmem:[#allocation7 + $0x28] sm:$0xff]
    %v582 = vld [vmem:[#allocation7 + $0x30] sm:$0xff]
    %v583 = vld [vmem:[#allocation7 + $0x38] sm:$0xff]
    %v584 = vld [vmem:[#allocation7 + $0x40] sm:$0xff]
    %v585 = vld [vmem:[#allocation7 + $0x48] sm:$0xff]
    %v586 = vld [vmem:[#allocation7 + $0x50] sm:$0xff]
    %v587 = vld [vmem:[#allocation7 + $0x58] sm:$0xff]
    %v588 = vld [vmem:[#allocation7 + $0x60] sm:$0xff]
    %v589 = vld [vmem:[#allocation7 + $0x68] sm:$0xff]
    %v590 = vld [vmem:[#allocation7 + $0x70] sm:$0xff]
    %v591 = vld [vmem:[#allocation7 + $0x78] sm:$0xff]
    %v592 = vld [vmem:[#allocation7 + $0x80] sm:$0xff]
    %v593 = vld [vmem:[#allocation7 + $0x88] sm:$0xff]
    %v594 = vld [vmem:[#allocation7 + $0x90] sm:$0xff]
    %v595 = vld [vmem:[#allocation7 + $0x98] sm:$0xff]
    %v596 = vld [vmem:[#allocation7 + $0xa0] sm:$0xff]
    %v597 = vld [vmem:[#allocation7 + $0xa8] sm:$0xff]
    %v598 = vld [vmem:[#allocation7 + $0xb0] sm:$0xff]
    %v599 = vld [vmem:[#allocation7 + $0xb8] sm:$0xff]
    %v600 = vld [vmem:[#allocation7 + $0xc0] sm:$0xff]
    %v601 = vld [vmem:[#allocation7 + $0xc8] sm:$0xff]
    %v602 = vld [vmem:[#allocation7 + $0xd0] sm:$0xff]
    %v603 = vld [vmem:[#allocation7 + $0xd8] sm:$0xff]
    %v604 = vld [vmem:[#allocation7 + $0xe0] sm:$0xff]
    %v605 = vld [vmem:[#allocation7 + $0xe8] sm:$0xff]
    %v606 = vld [vmem:[#allocation7 + $0xf0] sm:$0xff]
    %v607 = vld [vmem:[#allocation7 + $0xf8] sm:$0xff]
    %v608 = vld [vmem:[#allocation7 + $0x100] sm:$0xff]
    %v609 = vld [vmem:[#allocation7 + $0x108] sm:$0xff]
    %v610 = vld [vmem:[#allocation7 + $0x110] sm:$0xff]
    %v611 = vld [vmem:[#allocation7 + $0x118] sm:$0xff]
    %v612 = vld [vmem:[#allocation7 + $0x120] sm:$0xff]
    %v613 = vld [vmem:[#allocation7 + $0x128] sm:$0xff]
    %v614 = vld [vmem:[#allocation7 + $0x130] sm:$0xff]
    %v615 = vld [vmem:[#allocation7 + $0x138] sm:$0xff]
    %v616 = vld [vmem:[#allocation7 + $0x140] sm:$0xff]
    %v617 = vld [vmem:[#allocation7 + $0x148] sm:$0xff]
    %v618 = vld [vmem:[#allocation7 + $0x150] sm:$0xff]
    %v619 = vld [vmem:[#allocation7 + $0x158] sm:$0xff]
    %v620 = vld [vmem:[#allocation7 + $0x160] sm:$0xff]
    %v621 = vld [vmem:[#allocation7 + $0x168] sm:$0xff]
    %v622 = vld [vmem:[#allocation7 + $0x170] sm:$0xff]
    %v623 = vld [vmem:[#allocation7 + $0x178] sm:$0xff]
    %v624 = vld [vmem:[#allocation7 + $0x180] sm:$0xff]
    %v625 = vld [vmem:[#allocation7 + $0x188] sm:$0xff]
    %v626 = vld [vmem:[#allocation7 + $0x190] sm:$0xff]
    %v627 = vld [vmem:[#allocation7 + $0x198] sm:$0xff]
    %v628 = vld [vmem:[#allocation7 + $0x1a0] sm:$0xff]
    %v629 = vld [vmem:[#allocation7 + $0x1a8] sm:$0xff]
    %v630 = vld [vmem:[#allocation7 + $0x1b0] sm:$0xff]
    %v631 = vld [vmem:[#allocation7 + $0x1b8] sm:$0xff]
    %v632 = vld [vmem:[#allocation7 + $0x1c0] sm:$0xff]
    %v633 = vld [vmem:[#allocation7 + $0x1c8] sm:$0xff]
    %v634 = vld [vmem:[#allocation7 + $0x1d0] sm:$0xff]
    %v635 = vld [vmem:[#allocation7 + $0x1d8] sm:$0xff]
    %v636 = vld [vmem:[#allocation7 + $0x1e0] sm:$0xff]
    %v637 = vld [vmem:[#allocation7 + $0x1e8] sm:$0xff]
    %v638 = vld [vmem:[#allocation7 + $0x1f0] sm:$0xff]
    %v639 = vld [vmem:[#allocation7 + $0x1f8] sm:$0xff]
    %v640 = vld [vmem:[#allocation7 + $0x200] sm:$0xff]
    %v641 = vld [vmem:[#allocation7 + $0x208] sm:$0xff]
    %v642 = vld [vmem:[#allocation7 + $0x210] sm:$0xff]
    %v643 = vld [vmem:[#allocation7 + $0x218] sm:$0xff]
    %v644 = vld [vmem:[#allocation7 + $0x220] sm:$0xff]
    %v645 = vld [vmem:[#allocation7 + $0x228] sm:$0xff]
    %v646 = vld [vmem:[#allocation7 + $0x230] sm:$0xff]
    %v647 = vld [vmem:[#allocation7 + $0x238] sm:$0xff]
    %v648 = vld [vmem:[#allocation7 + $0x240] sm:$0xff]
    %v649 = vld [vmem:[#allocation7 + $0x248] sm:$0xff]
    %v650 = vld [vmem:[#allocation7 + $0x250] sm:$0xff]
    %v651 = vld [vmem:[#allocation7 + $0x258] sm:$0xff]
    %v652 = vld [vmem:[#allocation7 + $0x260] sm:$0xff]
    %v653 = vld [vmem:[#allocation7 + $0x268] sm:$0xff]
    %v654 = vld [vmem:[#allocation7 + $0x270] sm:$0xff]
    %v655 = vld [vmem:[#allocation7 + $0x278] sm:$0xff]
    %v656 = vld [vmem:[#allocation7 + $0x280] sm:$0xff]
    %v657 = vld [vmem:[#allocation7 + $0x288] sm:$0xff]
    %v658 = vld [vmem:[#allocation7 + $0x290] sm:$0xff]
    %v659 = vld [vmem:[#allocation7 + $0x298] sm:$0xff]
    %v660 = vld [vmem:[#allocation7 + $0x2a0] sm:$0xff]
    %v661 = vld [vmem:[#allocation7 + $0x2a8] sm:$0xff]
    %v662 = vld [vmem:[#allocation7 + $0x2b0] sm:$0xff]
    %v663 = vld [vmem:[#allocation7 + $0x2b8] sm:$0xff]
    %v664 = vld [vmem:[#allocation7 + $0x2c0] sm:$0xff]
    %v665 = vld [vmem:[#allocation7 + $0x2c8] sm:$0xff]
    %v666 = vld [vmem:[#allocation7 + $0x2d0] sm:$0xff]
    %v667 = vld [vmem:[#allocation7 + $0x2d8] sm:$0xff]
    %v668 = vld [vmem:[#allocation7 + $0x2e0] sm:$0xff]
    %v669 = vld [vmem:[#allocation7 + $0x2e8] sm:$0xff]
    %v670 = vld [vmem:[#allocation7 + $0x2f0] sm:$0xff]
    %v671 = vld [vmem:[#allocation7 + $0x2f8] sm:$0xff]
    %v672 = vld [vmem:[#allocation7 + $0x300] sm:$0xff]
    %v673 = vld [vmem:[#allocation7 + $0x308] sm:$0xff]
    %v674 = vld [vmem:[#allocation7 + $0x310] sm:$0xff]
    %v675 = vld [vmem:[#allocation7 + $0x318] sm:$0xff]
    %v676 = vld [vmem:[#allocation7 + $0x320] sm:$0xff]
    %v677 = vld [vmem:[#allocation7 + $0x328] sm:$0xff]
    %v678 = vld [vmem:[#allocation7 + $0x330] sm:$0xff]
    %v679 = vld [vmem:[#allocation7 + $0x338] sm:$0xff]
    %v680 = vld [vmem:[#allocation7 + $0x340] sm:$0xff]
    %v681 = vld [vmem:[#allocation7 + $0x348] sm:$0xff]
    %v682 = vld [vmem:[#allocation7 + $0x350] sm:$0xff]
    %v683 = vld [vmem:[#allocation7 + $0x358] sm:$0xff]
    %v684 = vld [vmem:[#allocation7 + $0x360] sm:$0xff]
    %v685 = vld [vmem:[#allocation7 + $0x368] sm:$0xff]
    %v686 = vld [vmem:[#allocation7 + $0x370] sm:$0xff]
    %v687 = vld [vmem:[#allocation7 + $0x378] sm:$0xff]
    %v688 = vld [vmem:[#allocation7 + $0x380] sm:$0xff]
    %v689 = vld [vmem:[#allocation7 + $0x388] sm:$0xff]
    %v690 = vld [vmem:[#allocation7 + $0x390] sm:$0xff]
    %v691 = vld [vmem:[#allocation7 + $0x398] sm:$0xff]
    %v692 = vld [vmem:[#allocation7 + $0x3a0] sm:$0xff]
    %v693 = vld [vmem:[#allocation7 + $0x3a8] sm:$0xff]
    %v694 = vld [vmem:[#allocation7 + $0x3b0] sm:$0xff]
    %v695 = vld [vmem:[#allocation7 + $0x3b8] sm:$0xff]
    %v696 = vld [vmem:[#allocation7 + $0x3c0] sm:$0xff]
    %v697 = vld [vmem:[#allocation7 + $0x3c8] sm:$0xff]
    %v698 = vld [vmem:[#allocation7 + $0x3d0] sm:$0xff]
    %v699 = vld [vmem:[#allocation7 + $0x3d8] sm:$0xff]
    %v700 = vld [vmem:[#allocation7 + $0x3e0] sm:$0xff]
    %v701 = vld [vmem:[#allocation7 + $0x3e8] sm:$0xff]
    %v702 = vld [vmem:[#allocation7 + $0x3f0] sm:$0xff]
    %v703 = vld [vmem:[#allocation7 + $0x3f8] sm:$0xff]
    %v704 = vld [vmem:[#allocation7 + $0x400] sm:$0xff]
    %v705 = vld [vmem:[#allocation7 + $0x408] sm:$0xff]
    %v706 = vld [vmem:[#allocation7 + $0x410] sm:$0xff]
    %v707 = vld [vmem:[#allocation7 + $0x418] sm:$0xff]
    %v708 = vld [vmem:[#allocation7 + $0x420] sm:$0xff]
    %v709 = vld [vmem:[#allocation7 + $0x428] sm:$0xff]
    %v710 = vld [vmem:[#allocation7 + $0x430] sm:$0xff]
    %v711 = vld [vmem:[#allocation7 + $0x438] sm:$0xff]
    %v712 = vld [vmem:[#allocation7 + $0x440] sm:$0xff]
    %v713 = vld [vmem:[#allocation7 + $0x448] sm:$0xff]
    %v714 = vld [vmem:[#allocation7 + $0x450] sm:$0xff]
    %v715 = vld [vmem:[#allocation7 + $0x458] sm:$0xff]
    %v716 = vld [vmem:[#allocation7 + $0x460] sm:$0xff]
    %v717 = vld [vmem:[#allocation7 + $0x468] sm:$0xff]
    %v718 = vld [vmem:[#allocation7 + $0x470] sm:$0xff]
    %v719 = vld [vmem:[#allocation7 + $0x478] sm:$0xff]
    %v720 = vld [vmem:[#allocation7 + $0x480] sm:$0xff]
    %v721 = vld [vmem:[#allocation7 + $0x488] sm:$0xff]
    %v722 = vld [vmem:[#allocation7 + $0x490] sm:$0xff]
    %v723 = vld [vmem:[#allocation7 + $0x498] sm:$0xff]
    %v724 = vld [vmem:[#allocation7 + $0x4a0] sm:$0xff]
    %v725 = vld [vmem:[#allocation7 + $0x4a8] sm:$0xff]
    %v726 = vld [vmem:[#allocation7 + $0x4b0] sm:$0xff]
    %v727 = vld [vmem:[#allocation7 + $0x4b8] sm:$0xff]
    %v728 = vld [vmem:[#allocation7 + $0x4c0] sm:$0xff]
    %v729 = vld [vmem:[#allocation7 + $0x4c8] sm:$0xff]
    %v730 = vld [vmem:[#allocation7 + $0x4d0] sm:$0xff]
    %v731 = vld [vmem:[#allocation7 + $0x4d8] sm:$0xff]
    %v732 = vld [vmem:[#allocation7 + $0x4e0] sm:$0xff]
    %v733 = vld [vmem:[#allocation7 + $0x4e8] sm:$0xff]
    %v734 = vld [vmem:[#allocation7 + $0x4f0] sm:$0xff]
    %v735 = vld [vmem:[#allocation7 + $0x4f8] sm:$0xff]
    %v736 = vld [vmem:[#allocation7 + $0x500] sm:$0xff]
    %v737 = vld [vmem:[#allocation7 + $0x508] sm:$0xff]
    %v738 = vld [vmem:[#allocation7 + $0x510] sm:$0xff]
    %v739 = vld [vmem:[#allocation7 + $0x518] sm:$0xff]
    %v740 = vld [vmem:[#allocation7 + $0x520] sm:$0xff]
    %v741 = vld [vmem:[#allocation7 + $0x528] sm:$0xff]
    %v742 = vld [vmem:[#allocation7 + $0x530] sm:$0xff]
    %v743 = vld [vmem:[#allocation7 + $0x538] sm:$0xff]
    %v744 = vld [vmem:[#allocation7 + $0x540] sm:$0xff]
    %v745 = vld [vmem:[#allocation7 + $0x548] sm:$0xff]
    %v746 = vld [vmem:[#allocation7 + $0x550] sm:$0xff]
    %v747 = vld [vmem:[#allocation7 + $0x558] sm:$0xff]
    %v748 = vld [vmem:[#allocation7 + $0x560] sm:$0xff]
    %v749 = vld [vmem:[#allocation7 + $0x568] sm:$0xff]
    %v750 = vld [vmem:[#allocation7 + $0x570] sm:$0xff]
    %v751 = vld [vmem:[#allocation7 + $0x578] sm:$0xff]
    %v752 = vld [vmem:[#allocation7 + $0x580] sm:$0xff]
    %v753 = vld [vmem:[#allocation7 + $0x588] sm:$0xff]
    %v754 = vld [vmem:[#allocation7 + $0x590] sm:$0xff]
    %v755 = vld [vmem:[#allocation7 + $0x598] sm:$0xff]
    %v756 = vld [vmem:[#allocation7 + $0x5a0] sm:$0xff]
    %v757 = vld [vmem:[#allocation7 + $0x5a8] sm:$0xff]
    %v758 = vld [vmem:[#allocation7 + $0x5b0] sm:$0xff]
    %v759 = vld [vmem:[#allocation7 + $0x5b8] sm:$0xff]
    %v760 = vld [vmem:[#allocation7 + $0x5c0] sm:$0xff]
    %v761 = vld [vmem:[#allocation7 + $0x5c8] sm:$0xff]
    %v762 = vld [vmem:[#allocation7 + $0x5d0] sm:$0xff]
    %v763 = vld [vmem:[#allocation7 + $0x5d8] sm:$0xff]
    %v764 = vld [vmem:[#allocation7 + $0x5e0] sm:$0xff]
    %v765 = vld [vmem:[#allocation7 + $0x5e8] sm:$0xff]
    %v766 = vld [vmem:[#allocation7 + $0x5f0] sm:$0xff]
    %v767 = vld [vmem:[#allocation7 + $0x5f8] sm:$0xff]
    %v768 = vld [vmem:[#allocation7 + $0x600] sm:$0xff]
    %v769 = vld [vmem:[#allocation7 + $0x608] sm:$0xff]
    %v770 = vld [vmem:[#allocation7 + $0x610] sm:$0xff]
    %v771 = vld [vmem:[#allocation7 + $0x618] sm:$0xff]
    %v772 = vld [vmem:[#allocation7 + $0x620] sm:$0xff]
    %v773 = vld [vmem:[#allocation7 + $0x628] sm:$0xff]
    %v774 = vld [vmem:[#allocation7 + $0x630] sm:$0xff]
    %v775 = vld [vmem:[#allocation7 + $0x638] sm:$0xff]
    %v776 = vld [vmem:[#allocation7 + $0x640] sm:$0xff]
    %v777 = vld [vmem:[#allocation7 + $0x648] sm:$0xff]
    %v778 = vld [vmem:[#allocation7 + $0x650] sm:$0xff]
    %v779 = vld [vmem:[#allocation7 + $0x658] sm:$0xff]
    %v780 = vld [vmem:[#allocation7 + $0x660] sm:$0xff]
    %v781 = vld [vmem:[#allocation7 + $0x668] sm:$0xff]
    %v782 = vld [vmem:[#allocation7 + $0x670] sm:$0xff]
    %v783 = vld [vmem:[#allocation7 + $0x678] sm:$0xff]
    %v784 = vld [vmem:[#allocation7 + $0x680] sm:$0xff]
    %v785 = vld [vmem:[#allocation7 + $0x688] sm:$0xff]
    %v786 = vld [vmem:[#allocation7 + $0x690] sm:$0xff]
    %v787 = vld [vmem:[#allocation7 + $0x698] sm:$0xff]
    %v788 = vld [vmem:[#allocation7 + $0x6a0] sm:$0xff]
    %v789 = vld [vmem:[#allocation7 + $0x6a8] sm:$0xff]
    %v790 = vld [vmem:[#allocation7 + $0x6b0] sm:$0xff]
    %v791 = vld [vmem:[#allocation7 + $0x6b8] sm:$0xff]
    %v792 = vld [vmem:[#allocation7 + $0x6c0] sm:$0xff]
    %v793 = vld [vmem:[#allocation7 + $0x6c8] sm:$0xff]
    %v794 = vld [vmem:[#allocation7 + $0x6d0] sm:$0xff]
    %v795 = vld [vmem:[#allocation7 + $0x6d8] sm:$0xff]
    %v796 = vld [vmem:[#allocation7 + $0x6e0] sm:$0xff]
    %v797 = vld [vmem:[#allocation7 + $0x6e8] sm:$0xff]
    %v798 = vld [vmem:[#allocation7 + $0x6f0] sm:$0xff]
    %v799 = vld [vmem:[#allocation7 + $0x6f8] sm:$0xff]
    %v800 = vld [vmem:[#allocation7 + $0x700] sm:$0xff]
    %v801 = vld [vmem:[#allocation7 + $0x708] sm:$0xff]
    %v802 = vld [vmem:[#allocation7 + $0x710] sm:$0xff]
    %v803 = vld [vmem:[#allocation7 + $0x718] sm:$0xff]
    %v804 = vld [vmem:[#allocation7 + $0x720] sm:$0xff]
    %v805 = vld [vmem:[#allocation7 + $0x728] sm:$0xff]
    %v806 = vld [vmem:[#allocation7 + $0x730] sm:$0xff]
    %v807 = vld [vmem:[#allocation7 + $0x738] sm:$0xff]
    %v808 = vld [vmem:[#allocation7 + $0x740] sm:$0xff]
    %v809 = vld [vmem:[#allocation7 + $0x748] sm:$0xff]
    %v810 = vld [vmem:[#allocation7 + $0x750] sm:$0xff]
    %v811 = vld [vmem:[#allocation7 + $0x758] sm:$0xff]
    %v812 = vld [vmem:[#allocation7 + $0x760] sm:$0xff]
    %v813 = vld [vmem:[#allocation7 + $0x768] sm:$0xff]
    %v814 = vld [vmem:[#allocation7 + $0x770] sm:$0xff]
    %v815 = vld [vmem:[#allocation7 + $0x778] sm:$0xff]
    %v816 = vld [vmem:[#allocation7 + $0x780] sm:$0xff]
    %v817 = vld [vmem:[#allocation7 + $0x788] sm:$0xff]
    %v818 = vld [vmem:[#allocation7 + $0x790] sm:$0xff]
    %v819 = vld [vmem:[#allocation7 + $0x798] sm:$0xff]
    %v820 = vld [vmem:[#allocation7 + $0x7a0] sm:$0xff]
    %v821 = vld [vmem:[#allocation7 + $0x7a8] sm:$0xff]
    %v822 = vld [vmem:[#allocation7 + $0x7b0] sm:$0xff]
    %v823 = vld [vmem:[#allocation7 + $0x7b8] sm:$0xff]
    %v824 = vld [vmem:[#allocation7 + $0x7c0] sm:$0xff]
    %v825 = vld [vmem:[#allocation7 + $0x7c8] sm:$0xff]
    %v826 = vld [vmem:[#allocation7 + $0x7d0] sm:$0xff]
    %v827 = vld [vmem:[#allocation7 + $0x7d8] sm:$0xff]
    %v828 = vld [vmem:[#allocation7 + $0x7e0] sm:$0xff]
    %v829 = vld [vmem:[#allocation7 + $0x7e8] sm:$0xff]
    %v830 = vld [vmem:[#allocation7 + $0x7f0] sm:$0xff]
    %v831 = vld [vmem:[#allocation7 + $0x7f8] sm:$0xff]
    %v832 = vstv %s575
    %v833 = vmul.f32 %v832, %v576
    %v834 = vmul.f32 %v832, %v577
    %v835 = vmul.f32 %v832, %v578
    %v836 = vmul.f32 %v832, %v579
    %v837 = vmul.f32 %v832, %v580
    %v838 = vmul.f32 %v832, %v581
    %v839 = vmul.f32 %v832, %v582
    %v840 = vmul.f32 %v832, %v583
    %v841 = vmul.f32 %v832, %v584
    %v842 = vmul.f32 %v832, %v585
    %v843 = vmul.f32 %v832, %v586
    %v844 = vmul.f32 %v832, %v587
    %v845 = vmul.f32 %v832, %v588
    %v846 = vmul.f32 %v832, %v589
    %v847 = vmul.f32 %v832, %v590
    %v848 = vmul.f32 %v832, %v591
    %v849 = vmul.f32 %v832, %v592
    %v850 = vmul.f32 %v832, %v593
    %v851 = vmul.f32 %v832, %v594
    %v852 = vmul.f32 %v832, %v595
    %v853 = vmul.f32 %v832, %v596
    %v854 = vmul.f32 %v832, %v597
    %v855 = vmul.f32 %v832, %v598
    %v856 = vmul.f32 %v832, %v599
    %v857 = vmul.f32 %v832, %v600
    %v858 = vmul.f32 %v832, %v601
    %v859 = vmul.f32 %v832, %v602
    %v860 = vmul.f32 %v832, %v603
    %v861 = vmul.f32 %v832, %v604
    %v862 = vmul.f32 %v832, %v605
    %v863 = vmul.f32 %v832, %v606
    %v864 = vmul.f32 %v832, %v607
    %v865 = vmul.f32 %v832, %v608
    %v866 = vmul.f32 %v832, %v609
    %v867 = vmul.f32 %v832, %v610
    %v868 = vmul.f32 %v832, %v611
    %v869 = vmul.f32 %v832, %v612
    %v870 = vmul.f32 %v832, %v613
    %v871 = vmul.f32 %v832, %v614
    %v872 = vmul.f32 %v832, %v615
    %v873 = vmul.f32 %v832, %v616
    %v874 = vmul.f32 %v832, %v617
    %v875 = vmul.f32 %v832, %v618
    %v876 = vmul.f32 %v832, %v619
    %v877 = vmul.f32 %v832, %v620
    %v878 = vmul.f32 %v832, %v621
    %v879 = vmul.f32 %v832, %v622
    %v880 = vmul.f32 %v832, %v623
    %v881 = vmul.f32 %v832, %v624
    %v882 = vmul.f32 %v832, %v625
    %v883 = vmul.f32 %v832, %v626
    %v884 = vmul.f32 %v832, %v627
    %v885 = vmul.f32 %v832, %v628
    %v886 = vmul.f32 %v832, %v629
    %v887 = vmul.f32 %v832, %v630
    %v888 = vmul.f32 %v832, %v631
    %v889 = vmul.f32 %v832, %v632
    %v890 = vmul.f32 %v832, %v633
    %v891 = vmul.f32 %v832, %v634
    %v892 = vmul.f32 %v832, %v635
    %v893 = vmul.f32 %v832, %v636
    %v894 = vmul.f32 %v832, %v637
    %v895 = vmul.f32 %v832, %v638
    %v896 = vmul.f32 %v832, %v639
    %v897 = vmul.f32 %v832, %v640
    %v898 = vmul.f32 %v832, %v641
    %v899 = vmul.f32 %v832, %v642
    %v900 = vmul.f32 %v832, %v643
    %v901 = vmul.f32 %v832, %v644
    %v902 = vmul.f32 %v832, %v645
    %v903 = vmul.f32 %v832, %v646
    %v904 = vmul.f32 %v832, %v647
    %v905 = vmul.f32 %v832, %v648
    %v906 = vmul.f32 %v832, %v649
    %v907 = vmul.f32 %v832, %v650
    %v908 = vmul.f32 %v832, %v651
    %v909 = vmul.f32 %v832, %v652
    %v910 = vmul.f32 %v832, %v653
    %v911 = vmul.f32 %v832, %v654
    %v912 = vmul.f32 %v832, %v655
    %v913 = vmul.f32 %v832, %v656
    %v914 = vmul.f32 %v832, %v657
    %v915 = vmul.f32 %v832, %v658
    %v916 = vmul.f32 %v832, %v659
    %v917 = vmul.f32 %v832, %v660
    %v918 = vmul.f32 %v832, %v661
    %v919 = vmul.f32 %v832, %v662
    %v920 = vmul.f32 %v832, %v663
    %v921 = vmul.f32 %v832, %v664
    %v922 = vmul.f32 %v832, %v665
    %v923 = vmul.f32 %v832, %v666
    %v924 = vmul.f32 %v832, %v667
    %v925 = vmul.f32 %v832, %v668
    %v926 = vmul.f32 %v832, %v669
    %v927 = vmul.f32 %v832, %v670
    %v928 = vmul.f32 %v832, %v671
    %v929 = vmul.f32 %v832, %v672
    %v930 = vmul.f32 %v832, %v673
    %v931 = vmul.f32 %v832, %v674
    %v932 = vmul.f32 %v832, %v675
    %v933 = vmul.f32 %v832, %v676
    %v934 = vmul.f32 %v832, %v677
    %v935 = vmul.f32 %v832, %v678
    %v936 = vmul.f32 %v832, %v679
    %v937 = vmul.f32 %v832, %v680
    %v938 = vmul.f32 %v832, %v681
    %v939 = vmul.f32 %v832, %v682
    %v940 = vmul.f32 %v832, %v683
    %v941 = vmul.f32 %v832, %v684
    %v942 = vmul.f32 %v832, %v685
    %v943 = vmul.f32 %v832, %v686
    %v944 = vmul.f32 %v832, %v687
    %v945 = vmul.f32 %v832, %v688
    %v946 = vmul.f32 %v832, %v689
    %v947 = vmul.f32 %v832, %v690
    %v948 = vmul.f32 %v832, %v691
    %v949 = vmul.f32 %v832, %v692
    %v950 = vmul.f32 %v832, %v693
    %v951 = vmul.f32 %v832, %v694
    %v952 = vmul.f32 %v832, %v695
    %v953 = vmul.f32 %v832, %v696
    %v954 = vmul.f32 %v832, %v697
    %v955 = vmul.f32 %v832, %v698
    %v956 = vmul.f32 %v832, %v699
    %v957 = vmul.f32 %v832, %v700
    %v958 = vmul.f32 %v832, %v701
    %v959 = vmul.f32 %v832, %v702
    %v960 = vmul.f32 %v832, %v703
    %v961 = vmul.f32 %v832, %v704
    %v962 = vmul.f32 %v832, %v705
    %v963 = vmul.f32 %v832, %v706
    %v964 = vmul.f32 %v832, %v707
    %v965 = vmul.f32 %v832, %v708
    %v966 = vmul.f32 %v832, %v709
    %v967 = vmul.f32 %v832, %v710
    %v968 = vmul.f32 %v832, %v711
    %v969 = vmul.f32 %v832, %v712
    %v970 = vmul.f32 %v832, %v713
    %v971 = vmul.f32 %v832, %v714
    %v972 = vmul.f32 %v832, %v715
    %v973 = vmul.f32 %v832, %v716
    %v974 = vmul.f32 %v832, %v717
    %v975 = vmul.f32 %v832, %v718
    %v976 = vmul.f32 %v832, %v719
    %v977 = vmul.f32 %v832, %v720
    %v978 = vmul.f32 %v832, %v721
    %v979 = vmul.f32 %v832, %v722
    %v980 = vmul.f32 %v832, %v723
    %v981 = vmul.f32 %v832, %v724
    %v982 = vmul.f32 %v832, %v725
    %v983 = vmul.f32 %v832, %v726
    %v984 = vmul.f32 %v832, %v727
    %v985 = vmul.f32 %v832, %v728
    %v986 = vmul.f32 %v832, %v729
    %v987 = vmul.f32 %v832, %v730
    %v988 = vmul.f32 %v832, %v731
    %v989 = vmul.f32 %v832, %v732
    %v990 = vmul.f32 %v832, %v733
    %v991 = vmul.f32 %v832, %v734
    %v992 = vmul.f32 %v832, %v735
    %v993 = vmul.f32 %v832, %v736
    %v994 = vmul.f32 %v832, %v737
    %v995 = vmul.f32 %v832, %v738
    %v996 = vmul.f32 %v832, %v739
    %v997 = vmul.f32 %v832, %v740
    %v998 = vmul.f32 %v832, %v741
    %v999 = vmul.f32 %v832, %v742
    %v1000 = vmul.f32 %v832, %v743
    %v1001 = vmul.f32 %v832, %v744
    %v1002 = vmul.f32 %v832, %v745
    %v1003 = vmul.f32 %v832, %v746
    %v1004 = vmul.f32 %v832, %v747
    %v1005 = vmul.f32 %v832, %v748
    %v1006 = vmul.f32 %v832, %v749
    %v1007 = vmul.f32 %v832, %v750
    %v1008 = vmul.f32 %v832, %v751
    %v1009 = vmul.f32 %v832, %v752
    %v1010 = vmul.f32 %v832, %v753
    %v1011 = vmul.f32 %v832, %v754
    %v1012 = vmul.f32 %v832, %v755
    %v1013 = vmul.f32 %v832, %v756
    %v1014 = vmul.f32 %v832, %v757
    %v1015 = vmul.f32 %v832, %v758
    %v1016 = vmul.f32 %v832, %v759
    %v1017 = vmul.f32 %v832, %v760
    %v1018 = vmul.f32 %v832, %v761
    %v1019 = vmul.f32 %v832, %v762
    %v1020 = vmul.f32 %v832, %v763
    %v1021 = vmul.f32 %v832, %v764
    %v1022 = vmul.f32 %v832, %v765
    %v1023 = vmul.f32 %v832, %v766
    %v1024 = vmul.f32 %v832, %v767
    %v1025 = vmul.f32 %v832, %v768
    %v1026 = vmul.f32 %v832, %v769
    %v1027 = vmul.f32 %v832, %v770
    %v1028 = vmul.f32 %v832, %v771
    %v1029 = vmul.f32 %v832, %v772
    %v1030 = vmul.f32 %v832, %v773
    %v1031 = vmul.f32 %v832, %v774
    %v1032 = vmul.f32 %v832, %v775
    %v1033 = vmul.f32 %v832, %v776
    %v1034 = vmul.f32 %v832, %v777
    %v1035 = vmul.f32 %v832, %v778
    %v1036 = vmul.f32 %v832, %v779
    %v1037 = vmul.f32 %v832, %v780
    %v1038 = vmul.f32 %v832, %v781
    %v1039 = vmul.f32 %v832, %v782
    %v1040 = vmul.f32 %v832, %v783
    %v1041 = vmul.f32 %v832, %v784
    %v1042 = vmul.f32 %v832, %v785
    %v1043 = vmul.f32 %v832, %v786
    %v1044 = vmul.f32 %v832, %v787
    %v1045 = vmul.f32 %v832, %v788
    %v1046 = vmul.f32 %v832, %v789
    %v1047 = vmul.f32 %v832, %v790
    %v1048 = vmul.f32 %v832, %v791
    %v1049 = vmul.f32 %v832, %v792
    %v1050 = vmul.f32 %v832, %v793
    %v1051 = vmul.f32 %v832, %v794
    %v1052 = vmul.f32 %v832, %v795
    %v1053 = vmul.f32 %v832, %v796
    %v1054 = vmul.f32 %v832, %v797
    %v1055 = vmul.f32 %v832, %v798
    %v1056 = vmul.f32 %v832, %v799
    %v1057 = vmul.f32 %v832, %v800
    %v1058 = vmul.f32 %v832, %v801
    %v1059 = vmul.f32 %v832, %v802
    %v1060 = vmul.f32 %v832, %v803
    %v1061 = vmul.f32 %v832, %v804
    %v1062 = vmul.f32 %v832, %v805
    %v1063 = vmul.f32 %v832, %v806
    %v1064 = vmul.f32 %v832, %v807
    %v1065 = vmul.f32 %v832, %v808
    %v1066 = vmul.f32 %v832, %v809
    %v1067 = vmul.f32 %v832, %v810
    %v1068 = vmul.f32 %v832, %v811
    %v1069 = vmul.f32 %v832, %v812
    %v1070 = vmul.f32 %v832, %v813
    %v1071 = vmul.f32 %v832, %v814
    %v1072 = vmul.f32 %v832, %v815
    %v1073 = vmul.f32 %v832, %v816
    %v1074 = vmul.f32 %v832, %v817
    %v1075 = vmul.f32 %v832, %v818
    %v1076 = vmul.f32 %v832, %v819
    %v1077 = vmul.f32 %v832, %v820
    %v1078 = vmul.f32 %v832, %v821
    %v1079 = vmul.f32 %v832, %v822
    %v1080 = vmul.f32 %v832, %v823
    %v1081 = vmul.f32 %v832, %v824
    %v1082 = vmul.f32 %v832, %v825
    %v1083 = vmul.f32 %v832, %v826
    %v1084 = vmul.f32 %v832, %v827
    %v1085 = vmul.f32 %v832, %v828
    %v1086 = vmul.f32 %v832, %v829
    %v1087 = vmul.f32 %v832, %v830
    %v1088 = vmul.f32 %v832, %v831
    %v1089 = vadd.f32 %v319, %v833
    %v1090 = vadd.f32 %v320, %v834
    %v1091 = vadd.f32 %v321, %v835
    %v1092 = vadd.f32 %v322, %v836
    %v1093 = vadd.f32 %v323, %v837
    %v1094 = vadd.f32 %v324, %v838
    %v1095 = vadd.f32 %v325, %v839
    %v1096 = vadd.f32 %v326, %v840
    %v1097 = vadd.f32 %v327, %v841
    %v1098 = vadd.f32 %v328, %v842
    %v1099 = vadd.f32 %v329, %v843
    %v1100 = vadd.f32 %v330, %v844
    %v1101 = vadd.f32 %v331, %v845
    %v1102 = vadd.f32 %v332, %v846
    %v1103 = vadd.f32 %v333, %v847
    %v1104 = vadd.f32 %v334, %v848
    %v1105 = vadd.f32 %v335, %v849
    %v1106 = vadd.f32 %v336, %v850
    %v1107 = vadd.f32 %v337, %v851
    %v1108 = vadd.f32 %v338, %v852
    %v1109 = vadd.f32 %v339, %v853
    %v1110 = vadd.f32 %v340, %v854
    %v1111 = vadd.f32 %v341, %v855
    %v1112 = vadd.f32 %v342, %v856
    %v1113 = vadd.f32 %v343, %v857
    %v1114 = vadd.f32 %v344, %v858
    %v1115 = vadd.f32 %v345, %v859
    %v1116 = vadd.f32 %v346, %v860
    %v1117 = vadd.f32 %v347, %v861
    %v1118 = vadd.f32 %v348, %v862
    %v1119 = vadd.f32 %v349, %v863
    %v1120 = vadd.f32 %v350, %v864
    %v1121 = vadd.f32 %v351, %v865
    %v1122 = vadd.f32 %v352, %v866
    %v1123 = vadd.f32 %v353, %v867
    %v1124 = vadd.f32 %v354, %v868
    %v1125 = vadd.f32 %v355, %v869
    %v1126 = vadd.f32 %v356, %v870
    %v1127 = vadd.f32 %v357, %v871
    %v1128 = vadd.f32 %v358, %v872
    %v1129 = vadd.f32 %v359, %v873
    %v1130 = vadd.f32 %v360, %v874
    %v1131 = vadd.f32 %v361, %v875
    %v1132 = vadd.f32 %v362, %v876
    %v1133 = vadd.f32 %v363, %v877
    %v1134 = vadd.f32 %v364, %v878
    %v1135 = vadd.f32 %v365, %v879
    %v1136 = vadd.f32 %v366, %v880
    %v1137 = vadd.f32 %v367, %v881
    %v1138 = vadd.f32 %v368, %v882
    %v1139 = vadd.f32 %v369, %v883
    %v1140 = vadd.f32 %v370, %v884
    %v1141 = vadd.f32 %v371, %v885
    %v1142 = vadd.f32 %v372, %v886
    %v1143 = vadd.f32 %v373, %v887
    %v1144 = vadd.f32 %v374, %v888
    %v1145 = vadd.f32 %v375, %v889
    %v1146 = vadd.f32 %v376, %v890
    %v1147 = vadd.f32 %v377, %v891
    %v1148 = vadd.f32 %v378, %v892
    %v1149 = vadd.f32 %v379, %v893
    %v1150 = vadd.f32 %v380, %v894
    %v1151 = vadd.f32 %v381, %v895
    %v1152 = vadd.f32 %v382, %v896
    %v1153 = vadd.f32 %v383, %v897
    %v1154 = vadd.f32 %v384, %v898
    %v1155 = vadd.f32 %v385, %v899
    %v1156 = vadd.f32 %v386, %v900
    %v1157 = vadd.f32 %v387, %v901
    %v1158 = vadd.f32 %v388, %v902
    %v1159 = vadd.f32 %v389, %v903
    %v1160 = vadd.f32 %v390, %v904
    %v1161 = vadd.f32 %v391, %v905
    %v1162 = vadd.f32 %v392, %v906
    %v1163 = vadd.f32 %v393, %v907
    %v1164 = vadd.f32 %v394, %v908
    %v1165 = vadd.f32 %v395, %v909
    %v1166 = vadd.f32 %v396, %v910
    %v1167 = vadd.f32 %v397, %v911
    %v1168 = vadd.f32 %v398, %v912
    %v1169 = vadd.f32 %v399, %v913
    %v1170 = vadd.f32 %v400, %v914
    %v1171 = vadd.f32 %v401, %v915
    %v1172 = vadd.f32 %v402, %v916
    %v1173 = vadd.f32 %v403, %v917
    %v1174 = vadd.f32 %v404, %v918
    %v1175 = vadd.f32 %v405, %v919
    %v1176 = vadd.f32 %v406, %v920
    %v1177 = vadd.f32 %v407, %v921
    %v1178 = vadd.f32 %v408, %v922
    %v1179 = vadd.f32 %v409, %v923
    %v1180 = vadd.f32 %v410, %v924
    %v1181 = vadd.f32 %v411, %v925
    %v1182 = vadd.f32 %v412, %v926
    %v1183 = vadd.f32 %v413, %v927
    %v1184 = vadd.f32 %v414, %v928
    %v1185 = vadd.f32 %v415, %v929
    %v1186 = vadd.f32 %v416, %v930
    %v1187 = vadd.f32 %v417, %v931
    %v1188 = vadd.f32 %v418, %v932
    %v1189 = vadd.f32 %v419, %v933
    %v1190 = vadd.f32 %v420, %v934
    %v1191 = vadd.f32 %v421, %v935
    %v1192 = vadd.f32 %v422, %v936
    %v1193 = vadd.f32 %v423, %v937
    %v1194 = vadd.f32 %v424, %v938
    %v1195 = vadd.f32 %v425, %v939
    %v1196 = vadd.f32 %v426, %v940
    %v1197 = vadd.f32 %v427, %v941
    %v1198 = vadd.f32 %v428, %v942
    %v1199 = vadd.f32 %v429, %v943
    %v1200 = vadd.f32 %v430, %v944
    %v1201 = vadd.f32 %v431, %v945
    %v1202 = vadd.f32 %v432, %v946
    %v1203 = vadd.f32 %v433, %v947
    %v1204 = vadd.f32 %v434, %v948
    %v1205 = vadd.f32 %v435, %v949
    %v1206 = vadd.f32 %v436, %v950
    %v1207 = vadd.f32 %v437, %v951
    %v1208 = vadd.f32 %v438, %v952
    %v1209 = vadd.f32 %v439, %v953
    %v1210 = vadd.f32 %v440, %v954
    %v1211 = vadd.f32 %v441, %v955
    %v1212 = vadd.f32 %v442, %v956
    %v1213 = vadd.f32 %v443, %v957
    %v1214 = vadd.f32 %v444, %v958
    %v1215 = vadd.f32 %v445, %v959
    %v1216 = vadd.f32 %v446, %v960
    %v1217 = vadd.f32 %v447, %v961
    %v1218 = vadd.f32 %v448, %v962
    %v1219 = vadd.f32 %v449, %v963
    %v1220 = vadd.f32 %v450, %v964
    %v1221 = vadd.f32 %v451, %v965
    %v1222 = vadd.f32 %v452, %v966
    %v1223 = vadd.f32 %v453, %v967
    %v1224 = vadd.f32 %v454, %v968
    %v1225 = vadd.f32 %v455, %v969
    %v1226 = vadd.f32 %v456, %v970
    %v1227 = vadd.f32 %v457, %v971
    %v1228 = vadd.f32 %v458, %v972
    %v1229 = vadd.f32 %v459, %v973
    %v1230 = vadd.f32 %v460, %v974
    %v1231 = vadd.f32 %v461, %v975
    %v1232 = vadd.f32 %v462, %v976
    %v1233 = vadd.f32 %v463, %v977
    %v1234 = vadd.f32 %v464, %v978
    %v1235 = vadd.f32 %v465, %v979
    %v1236 = vadd.f32 %v466, %v980
    %v1237 = vadd.f32 %v467, %v981
    %v1238 = vadd.f32 %v468, %v982
    %v1239 = vadd.f32 %v469, %v983
    %v1240 = vadd.f32 %v470, %v984
    %v1241 = vadd.f32 %v471, %v985
    %v1242 = vadd.f32 %v472, %v986
    %v1243 = vadd.f32 %v473, %v987
    %v1244 = vadd.f32 %v474, %v988
    %v1245 = vadd.f32 %v475, %v989
    %v1246 = vadd.f32 %v476, %v990
    %v1247 = vadd.f32 %v477, %v991
    %v1248 = vadd.f32 %v478, %v992
    %v1249 = vadd.f32 %v479, %v993
    %v1250 = vadd.f32 %v480, %v994
    %v1251 = vadd.f32 %v481, %v995
    %v1252 = vadd.f32 %v482, %v996
    %v1253 = vadd.f32 %v483, %v997
    %v1254 = vadd.f32 %v484, %v998
    %v1255 = vadd.f32 %v485, %v999
    %v1256 = vadd.f32 %v486, %v1000
    %v1257 = vadd.f32 %v487, %v1001
    %v1258 = vadd.f32 %v488, %v1002
    %v1259 = vadd.f32 %v489, %v1003
    %v1260 = vadd.f32 %v490, %v1004
    %v1261 = vadd.f32 %v491, %v1005
    %v1262 = vadd.f32 %v492, %v1006
    %v1263 = vadd.f32 %v493, %v1007
    %v1264 = vadd.f32 %v494, %v1008
    %v1265 = vadd.f32 %v495, %v1009
    %v1266 = vadd.f32 %v496, %v1010
    %v1267 = vadd.f32 %v497, %v1011
    %v1268 = vadd.f32 %v498, %v1012
    %v1269 = vadd.f32 %v499, %v1013
    %v1270 = vadd.f32 %v500, %v1014
    %v1271 = vadd.f32 %v501, %v1015
    %v1272 = vadd.f32 %v502, %v1016
    %v1273 = vadd.f32 %v503, %v1017
    %v1274 = vadd.f32 %v504, %v1018
    %v1275 = vadd.f32 %v505, %v1019
    %v1276 = vadd.f32 %v506, %v1020
    %v1277 = vadd.f32 %v507, %v1021
    %v1278 = vadd.f32 %v508, %v1022
    %v1279 = vadd.f32 %v509, %v1023
    %v1280 = vadd.f32 %v510, %v1024
    %v1281 = vadd.f32 %v511, %v1025
    %v1282 = vadd.f32 %v512, %v1026
    %v1283 = vadd.f32 %v513, %v1027
    %v1284 = vadd.f32 %v514, %v1028
    %v1285 = vadd.f32 %v515, %v1029
    %v1286 = vadd.f32 %v516, %v1030
    %v1287 = vadd.f32 %v517, %v1031
    %v1288 = vadd.f32 %v518, %v1032
    %v1289 = vadd.f32 %v519, %v1033
    %v1290 = vadd.f32 %v520, %v1034
    %v1291 = vadd.f32 %v521, %v1035
    %v1292 = vadd.f32 %v522, %v1036
    %v1293 = vadd.f32 %v523, %v1037
    %v1294 = vadd.f32 %v524, %v1038
    %v1295 = vadd.f32 %v525, %v1039
    %v1296 = vadd.f32 %v526, %v1040
    %v1297 = vadd.f32 %v527, %v1041
    %v1298 = vadd.f32 %v528, %v1042
    %v1299 = vadd.f32 %v529, %v1043
    %v1300 = vadd.f32 %v530, %v1044
    %v1301 = vadd.f32 %v531, %v1045
    %v1302 = vadd.f32 %v532, %v1046
    %v1303 = vadd.f32 %v533, %v1047
    %v1304 = vadd.f32 %v534, %v1048
    %v1305 = vadd.f32 %v535, %v1049
    %v1306 = vadd.f32 %v536, %v1050
    %v1307 = vadd.f32 %v537, %v1051
    %v1308 = vadd.f32 %v538, %v1052
    %v1309 = vadd.f32 %v539, %v1053
    %v1310 = vadd.f32 %v540, %v1054
    %v1311 = vadd.f32 %v541, %v1055
    %v1312 = vadd.f32 %v542, %v1056
    %v1313 = vadd.f32 %v543, %v1057
    %v1314 = vadd.f32 %v544, %v1058
    %v1315 = vadd.f32 %v545, %v1059
    %v1316 = vadd.f32 %v546, %v1060
    %v1317 = vadd.f32 %v547, %v1061
    %v1318 = vadd.f32 %v548, %v1062
    %v1319 = vadd.f32 %v549, %v1063
    %v1320 = vadd.f32 %v550, %v1064
    %v1321 = vadd.f32 %v551, %v1065
    %v1322 = vadd.f32 %v552, %v1066
    %v1323 = vadd.f32 %v553, %v1067
    %v1324 = vadd.f32 %v554, %v1068
    %v1325 = vadd.f32 %v555, %v1069
    %v1326 = vadd.f32 %v556, %v1070
    %v1327 = vadd.f32 %v557, %v1071
    %v1328 = vadd.f32 %v558, %v1072
    %v1329 = vadd.f32 %v559, %v1073
    %v1330 = vadd.f32 %v560, %v1074
    %v1331 = vadd.f32 %v561, %v1075
    %v1332 = vadd.f32 %v562, %v1076
    %v1333 = vadd.f32 %v563, %v1077
    %v1334 = vadd.f32 %v564, %v1078
    %v1335 = vadd.f32 %v565, %v1079
    %v1336 = vadd.f32 %v566, %v1080
    %v1337 = vadd.f32 %v567, %v1081
    %v1338 = vadd.f32 %v568, %v1082
    %v1339 = vadd.f32 %v569, %v1083
    %v1340 = vadd.f32 %v570, %v1084
    %v1341 = vadd.f32 %v571, %v1085
    %v1342 = vadd.f32 %v572, %v1086
    %v1343 = vadd.f32 %v573, %v1087
    %v1344 = vadd.f32 %v574, %v1088
    %s1345 = sld [smem:[#allocation3 + $0x2]]
    %v1346 = vld [vmem:[#allocation9] sm:$0xff]
    %v1347 = vld [vmem:[#allocation9 + $0x8] sm:$0xff]
    %v1348 = vld [vmem:[#allocation9 + $0x10] sm:$0xff]
    %v1349 = vld [vmem:[#allocation9 + $0x18] sm:$0xff]
    %v1350 = vld [vmem:[#allocation9 + $0x20] sm:$0xff]
    %v1351 = vld [vmem:[#allocation9 + $0x28] sm:$0xff]
    %v1352 = vld [vmem:[#allocation9 + $0x30] sm:$0xff]
    %v1353 = vld [vmem:[#allocation9 + $0x38] sm:$0xff]
    %v1354 = vld [vmem:[#allocation9 + $0x40] sm:$0xff]
    %v1355 = vld [vmem:[#allocation9 + $0x48] sm:$0xff]
    %v1356 = vld [vmem:[#allocation9 + $0x50] sm:$0xff]
    %v1357 = vld [vmem:[#allocation9 + $0x58] sm:$0xff]
    %v1358 = vld [vmem:[#allocation9 + $0x60] sm:$0xff]
    %v1359 = vld [vmem:[#allocation9 + $0x68] sm:$0xff]
    %v1360 = vld [vmem:[#allocation9 + $0x70] sm:$0xff]
    %v1361 = vld [vmem:[#allocation9 + $0x78] sm:$0xff]
    %v1362 = vld [vmem:[#allocation9 + $0x80] sm:$0xff]
    %v1363 = vld [vmem:[#allocation9 + $0x88] sm:$0xff]
    %v1364 = vld [vmem:[#allocation9 + $0x90] sm:$0xff]
    %v1365 = vld [vmem:[#allocation9 + $0x98] sm:$0xff]
    %v1366 = vld [vmem:[#allocation9 + $0xa0] sm:$0xff]
    %v1367 = vld [vmem:[#allocation9 + $0xa8] sm:$0xff]
    %v1368 = vld [vmem:[#allocation9 + $0xb0] sm:$0xff]
    %v1369 = vld [vmem:[#allocation9 + $0xb8] sm:$0xff]
    %v1370 = vld [vmem:[#allocation9 + $0xc0] sm:$0xff]
    %v1371 = vld [vmem:[#allocation9 + $0xc8] sm:$0xff]
    %v1372 = vld [vmem:[#allocation9 + $0xd0] sm:$0xff]
    %v1373 = vld [vmem:[#allocation9 + $0xd8] sm:$0xff]
    %v1374 = vld [vmem:[#allocation9 + $0xe0] sm:$0xff]
    %v1375 = vld [vmem:[#allocation9 + $0xe8] sm:$0xff]
    %v1376 = vld [vmem:[#allocation9 + $0xf0] sm:$0xff]
    %v1377 = vld [vmem:[#allocation9 + $0xf8] sm:$0xff]
    %v1378 = vld [vmem:[#allocation9 + $0x100] sm:$0xff]
    %v1379 = vld [vmem:[#allocation9 + $0x108] sm:$0xff]
    %v1380 = vld [vmem:[#allocation9 + $0x110] sm:$0xff]
    %v1381 = vld [vmem:[#allocation9 + $0x118] sm:$0xff]
    %v1382 = vld [vmem:[#allocation9 + $0x120] sm:$0xff]
    %v1383 = vld [vmem:[#allocation9 + $0x128] sm:$0xff]
    %v1384 = vld [vmem:[#allocation9 + $0x130] sm:$0xff]
    %v1385 = vld [vmem:[#allocation9 + $0x138] sm:$0xff]
    %v1386 = vld [vmem:[#allocation9 + $0x140] sm:$0xff]
    %v1387 = vld [vmem:[#allocation9 + $0x148] sm:$0xff]
    %v1388 = vld [vmem:[#allocation9 + $0x150] sm:$0xff]
    %v1389 = vld [vmem:[#allocation9 + $0x158] sm:$0xff]
    %v1390 = vld [vmem:[#allocation9 + $0x160] sm:$0xff]
    %v1391 = vld [vmem:[#allocation9 + $0x168] sm:$0xff]
    %v1392 = vld [vmem:[#allocation9 + $0x170] sm:$0xff]
    %v1393 = vld [vmem:[#allocation9 + $0x178] sm:$0xff]
    %v1394 = vld [vmem:[#allocation9 + $0x180] sm:$0xff]
    %v1395 = vld [vmem:[#allocation9 + $0x188] sm:$0xff]
    %v1396 = vld [vmem:[#allocation9 + $0x190] sm:$0xff]
    %v1397 = vld [vmem:[#allocation9 + $0x198] sm:$0xff]
    %v1398 = vld [vmem:[#allocation9 + $0x1a0] sm:$0xff]
    %v1399 = vld [vmem:[#allocation9 + $0x1a8] sm:$0xff]
    %v1400 = vld [vmem:[#allocation9 + $0x1b0] sm:$0xff]
    %v1401 = vld [vmem:[#allocation9 + $0x1b8] sm:$0xff]
    %v1402 = vld [vmem:[#allocation9 + $0x1c0] sm:$0xff]
    %v1403 = vld [vmem:[#allocation9 + $0x1c8] sm:$0xff]
    %v1404 = vld [vmem:[#allocation9 + $0x1d0] sm:$0xff]
    %v1405 = vld [vmem:[#allocation9 + $0x1d8] sm:$0xff]
    %v1406 = vld [vmem:[#allocation9 + $0x1e0] sm:$0xff]
    %v1407 = vld [vmem:[#allocation9 + $0x1e8] sm:$0xff]
    %v1408 = vld [vmem:[#allocation9 + $0x1f0] sm:$0xff]
    %v1409 = vld [vmem:[#allocation9 + $0x1f8] sm:$0xff]
    %v1410 = vld [vmem:[#allocation9 + $0x200] sm:$0xff]
    %v1411 = vld [vmem:[#allocation9 + $0x208] sm:$0xff]
    %v1412 = vld [vmem:[#allocation9 + $0x210] sm:$0xff]
    %v1413 = vld [vmem:[#allocation9 + $0x218] sm:$0xff]
    %v1414 = vld [vmem:[#allocation9 + $0x220] sm:$0xff]
    %v1415 = vld [vmem:[#allocation9 + $0x228] sm:$0xff]
    %v1416 = vld [vmem:[#allocation9 + $0x230] sm:$0xff]
    %v1417 = vld [vmem:[#allocation9 + $0x238] sm:$0xff]
    %v1418 = vld [vmem:[#allocation9 + $0x240] sm:$0xff]
    %v1419 = vld [vmem:[#allocation9 + $0x248] sm:$0xff]
    %v1420 = vld [vmem:[#allocation9 + $0x250] sm:$0xff]
    %v1421 = vld [vmem:[#allocation9 + $0x258] sm:$0xff]
    %v1422 = vld [vmem:[#allocation9 + $0x260] sm:$0xff]
    %v1423 = vld [vmem:[#allocation9 + $0x268] sm:$0xff]
    %v1424 = vld [vmem:[#allocation9 + $0x270] sm:$0xff]
    %v1425 = vld [vmem:[#allocation9 + $0x278] sm:$0xff]
    %v1426 = vld [vmem:[#allocation9 + $0x280] sm:$0xff]
    %v1427 = vld [vmem:[#allocation9 + $0x288] sm:$0xff]
    %v1428 = vld [vmem:[#allocation9 + $0x290] sm:$0xff]
    %v1429 = vld [vmem:[#allocation9 + $0x298] sm:$0xff]
    %v1430 = vld [vmem:[#allocation9 + $0x2a0] sm:$0xff]
    %v1431 = vld [vmem:[#allocation9 + $0x2a8] sm:$0xff]
    %v1432 = vld [vmem:[#allocation9 + $0x2b0] sm:$0xff]
    %v1433 = vld [vmem:[#allocation9 + $0x2b8] sm:$0xff]
    %v1434 = vld [vmem:[#allocation9 + $0x2c0] sm:$0xff]
    %v1435 = vld [vmem:[#allocation9 + $0x2c8] sm:$0xff]
    %v1436 = vld [vmem:[#allocation9 + $0x2d0] sm:$0xff]
    %v1437 = vld [vmem:[#allocation9 + $0x2d8] sm:$0xff]
    %v1438 = vld [vmem:[#allocation9 + $0x2e0] sm:$0xff]
    %v1439 = vld [vmem:[#allocation9 + $0x2e8] sm:$0xff]
    %v1440 = vld [vmem:[#allocation9 + $0x2f0] sm:$0xff]
    %v1441 = vld [vmem:[#allocation9 + $0x2f8] sm:$0xff]
    %v1442 = vld [vmem:[#allocation9 + $0x300] sm:$0xff]
    %v1443 = vld [vmem:[#allocation9 + $0x308] sm:$0xff]
    %v1444 = vld [vmem:[#allocation9 + $0x310] sm:$0xff]
    %v1445 = vld [vmem:[#allocation9 + $0x318] sm:$0xff]
    %v1446 = vld [vmem:[#allocation9 + $0x320] sm:$0xff]
    %v1447 = vld [vmem:[#allocation9 + $0x328] sm:$0xff]
    %v1448 = vld [vmem:[#allocation9 + $0x330] sm:$0xff]
    %v1449 = vld [vmem:[#allocation9 + $0x338] sm:$0xff]
    %v1450 = vld [vmem:[#allocation9 + $0x340] sm:$0xff]
    %v1451 = vld [vmem:[#allocation9 + $0x348] sm:$0xff]
    %v1452 = vld [vmem:[#allocation9 + $0x350] sm:$0xff]
    %v1453 = vld [vmem:[#allocation9 + $0x358] sm:$0xff]
    %v1454 = vld [vmem:[#allocation9 + $0x360] sm:$0xff]
    %v1455 = vld [vmem:[#allocation9 + $0x368] sm:$0xff]
    %v1456 = vld [vmem:[#allocation9 + $0x370] sm:$0xff]
    %v1457 = vld [vmem:[#allocation9 + $0x378] sm:$0xff]
    %v1458 = vld [vmem:[#allocation9 + $0x380] sm:$0xff]
    %v1459 = vld [vmem:[#allocation9 + $0x388] sm:$0xff]
    %v1460 = vld [vmem:[#allocation9 + $0x390] sm:$0xff]
    %v1461 = vld [vmem:[#allocation9 + $0x398] sm:$0xff]
    %v1462 = vld [vmem:[#allocation9 + $0x3a0] sm:$0xff]
    %v1463 = vld [vmem:[#allocation9 + $0x3a8] sm:$0xff]
    %v1464 = vld [vmem:[#allocation9 + $0x3b0] sm:$0xff]
    %v1465 = vld [vmem:[#allocation9 + $0x3b8] sm:$0xff]
    %v1466 = vld [vmem:[#allocation9 + $0x3c0] sm:$0xff]
    %v1467 = vld [vmem:[#allocation9 + $0x3c8] sm:$0xff]
    %v1468 = vld [vmem:[#allocation9 + $0x3d0] sm:$0xff]
    %v1469 = vld [vmem:[#allocation9 + $0x3d8] sm:$0xff]
    %v1470 = vld [vmem:[#allocation9 + $0x3e0] sm:$0xff]
    %v1471 = vld [vmem:[#allocation9 + $0x3e8] sm:$0xff]
    %v1472 = vld [vmem:[#allocation9 + $0x3f0] sm:$0xff]
    %v1473 = vld [vmem:[#allocation9 + $0x3f8] sm:$0xff]
    %v1474 = vld [vmem:[#allocation9 + $0x400] sm:$0xff]
    %v1475 = vld [vmem:[#allocation9 + $0x408] sm:$0xff]
    %v1476 = vld [vmem:[#allocation9 + $0x410] sm:$0xff]
    %v1477 = vld [vmem:[#allocation9 + $0x418] sm:$0xff]
    %v1478 = vld [vmem:[#allocation9 + $0x420] sm:$0xff]
    %v1479 = vld [vmem:[#allocation9 + $0x428] sm:$0xff]
    %v1480 = vld [vmem:[#allocation9 + $0x430] sm:$0xff]
    %v1481 = vld [vmem:[#allocation9 + $0x438] sm:$0xff]
    %v1482 = vld [vmem:[#allocation9 + $0x440] sm:$0xff]
    %v1483 = vld [vmem:[#allocation9 + $0x448] sm:$0xff]
    %v1484 = vld [vmem:[#allocation9 + $0x450] sm:$0xff]
    %v1485 = vld [vmem:[#allocation9 + $0x458] sm:$0xff]
    %v1486 = vld [vmem:[#allocation9 + $0x460] sm:$0xff]
    %v1487 = vld [vmem:[#allocation9 + $0x468] sm:$0xff]
    %v1488 = vld [vmem:[#allocation9 + $0x470] sm:$0xff]
    %v1489 = vld [vmem:[#allocation9 + $0x478] sm:$0xff]
    %v1490 = vld [vmem:[#allocation9 + $0x480] sm:$0xff]
    %v1491 = vld [vmem:[#allocation9 + $0x488] sm:$0xff]
    %v1492 = vld [vmem:[#allocation9 + $0x490] sm:$0xff]
    %v1493 = vld [vmem:[#allocation9 + $0x498] sm:$0xff]
    %v1494 = vld [vmem:[#allocation9 + $0x4a0] sm:$0xff]
    %v1495 = vld [vmem:[#allocation9 + $0x4a8] sm:$0xff]
    %v1496 = vld [vmem:[#allocation9 + $0x4b0] sm:$0xff]
    %v1497 = vld [vmem:[#allocation9 + $0x4b8] sm:$0xff]
    %v1498 = vld [vmem:[#allocation9 + $0x4c0] sm:$0xff]
    %v1499 = vld [vmem:[#allocation9 + $0x4c8] sm:$0xff]
    %v1500 = vld [vmem:[#allocation9 + $0x4d0] sm:$0xff]
    %v1501 = vld [vmem:[#allocation9 + $0x4d8] sm:$0xff]
    %v1502 = vld [vmem:[#allocation9 + $0x4e0] sm:$0xff]
    %v1503 = vld [vmem:[#allocation9 + $0x4e8] sm:$0xff]
    %v1504 = vld [vmem:[#allocation9 + $0x4f0] sm:$0xff]
    %v1505 = vld [vmem:[#allocation9 + $0x4f8] sm:$0xff]
    %v1506 = vld [vmem:[#allocation9 + $0x500] sm:$0xff]
    %v1507 = vld [vmem:[#allocation9 + $0x508] sm:$0xff]
    %v1508 = vld [vmem:[#allocation9 + $0x510] sm:$0xff]
    %v1509 = vld [vmem:[#allocation9 + $0x518] sm:$0xff]
    %v1510 = vld [vmem:[#allocation9 + $0x520] sm:$0xff]
    %v1511 = vld [vmem:[#allocation9 + $0x528] sm:$0xff]
    %v1512 = vld [vmem:[#allocation9 + $0x530] sm:$0xff]
    %v1513 = vld [vmem:[#allocation9 + $0x538] sm:$0xff]
    %v1514 = vld [vmem:[#allocation9 + $0x540] sm:$0xff]
    %v1515 = vld [vmem:[#allocation9 + $0x548] sm:$0xff]
    %v1516 = vld [vmem:[#allocation9 + $0x550] sm:$0xff]
    %v1517 = vld [vmem:[#allocation9 + $0x558] sm:$0xff]
    %v1518 = vld [vmem:[#allocation9 + $0x560] sm:$0xff]
    %v1519 = vld [vmem:[#allocation9 + $0x568] sm:$0xff]
    %v1520 = vld [vmem:[#allocation9 + $0x570] sm:$0xff]
    %v1521 = vld [vmem:[#allocation9 + $0x578] sm:$0xff]
    %v1522 = vld [vmem:[#allocation9 + $0x580] sm:$0xff]
    %v1523 = vld [vmem:[#allocation9 + $0x588] sm:$0xff]
    %v1524 = vld [vmem:[#allocation9 + $0x590] sm:$0xff]
    %v1525 = vld [vmem:[#allocation9 + $0x598] sm:$0xff]
    %v1526 = vld [vmem:[#allocation9 + $0x5a0] sm:$0xff]
    %v1527 = vld [vmem:[#allocation9 + $0x5a8] sm:$0xff]
    %v1528 = vld [vmem:[#allocation9 + $0x5b0] sm:$0xff]
    %v1529 = vld [vmem:[#allocation9 + $0x5b8] sm:$0xff]
    %v1530 = vld [vmem:[#allocation9 + $0x5c0] sm:$0xff]
    %v1531 = vld [vmem:[#allocation9 + $0x5c8] sm:$0xff]
    %v1532 = vld [vmem:[#allocation9 + $0x5d0] sm:$0xff]
    %v1533 = vld [vmem:[#allocation9 + $0x5d8] sm:$0xff]
    %v1534 = vld [vmem:[#allocation9 + $0x5e0] sm:$0xff]
    %v1535 = vld [vmem:[#allocation9 + $0x5e8] sm:$0xff]
    %v1536 = vld [vmem:[#allocation9 + $0x5f0] sm:$0xff]
    %v1537 = vld [vmem:[#allocation9 + $0x5f8] sm:$0xff]
    %v1538 = vld [vmem:[#allocation9 + $0x600] sm:$0xff]
    %v1539 = vld [vmem:[#allocation9 + $0x608] sm:$0xff]
    %v1540 = vld [vmem:[#allocation9 + $0x610] sm:$0xff]
    %v1541 = vld [vmem:[#allocation9 + $0x618] sm:$0xff]
    %v1542 = vld [vmem:[#allocation9 + $0x620] sm:$0xff]
    %v1543 = vld [vmem:[#allocation9 + $0x628] sm:$0xff]
    %v1544 = vld [vmem:[#allocation9 + $0x630] sm:$0xff]
    %v1545 = vld [vmem:[#allocation9 + $0x638] sm:$0xff]
    %v1546 = vld [vmem:[#allocation9 + $0x640] sm:$0xff]
    %v1547 = vld [vmem:[#allocation9 + $0x648] sm:$0xff]
    %v1548 = vld [vmem:[#allocation9 + $0x650] sm:$0xff]
    %v1549 = vld [vmem:[#allocation9 + $0x658] sm:$0xff]
    %v1550 = vld [vmem:[#allocation9 + $0x660] sm:$0xff]
    %v1551 = vld [vmem:[#allocation9 + $0x668] sm:$0xff]
    %v1552 = vld [vmem:[#allocation9 + $0x670] sm:$0xff]
    %v1553 = vld [vmem:[#allocation9 + $0x678] sm:$0xff]
    %v1554 = vld [vmem:[#allocation9 + $0x680] sm:$0xff]
    %v1555 = vld [vmem:[#allocation9 + $0x688] sm:$0xff]
    %v1556 = vld [vmem:[#allocation9 + $0x690] sm:$0xff]
    %v1557 = vld [vmem:[#allocation9 + $0x698] sm:$0xff]
    %v1558 = vld [vmem:[#allocation9 + $0x6a0] sm:$0xff]
    %v1559 = vld [vmem:[#allocation9 + $0x6a8] sm:$0xff]
    %v1560 = vld [vmem:[#allocation9 + $0x6b0] sm:$0xff]
    %v1561 = vld [vmem:[#allocation9 + $0x6b8] sm:$0xff]
    %v1562 = vld [vmem:[#allocation9 + $0x6c0] sm:$0xff]
    %v1563 = vld [vmem:[#allocation9 + $0x6c8] sm:$0xff]
    %v1564 = vld [vmem:[#allocation9 + $0x6d0] sm:$0xff]
    %v1565 = vld [vmem:[#allocation9 + $0x6d8] sm:$0xff]
    %v1566 = vld [vmem:[#allocation9 + $0x6e0] sm:$0xff]
    %v1567 = vld [vmem:[#allocation9 + $0x6e8] sm:$0xff]
    %v1568 = vld [vmem:[#allocation9 + $0x6f0] sm:$0xff]
    %v1569 = vld [vmem:[#allocation9 + $0x6f8] sm:$0xff]
    %v1570 = vld [vmem:[#allocation9 + $0x700] sm:$0xff]
    %v1571 = vld [vmem:[#allocation9 + $0x708] sm:$0xff]
    %v1572 = vld [vmem:[#allocation9 + $0x710] sm:$0xff]
    %v1573 = vld [vmem:[#allocation9 + $0x718] sm:$0xff]
    %v1574 = vld [vmem:[#allocation9 + $0x720] sm:$0xff]
    %v1575 = vld [vmem:[#allocation9 + $0x728] sm:$0xff]
    %v1576 = vld [vmem:[#allocation9 + $0x730] sm:$0xff]
    %v1577 = vld [vmem:[#allocation9 + $0x738] sm:$0xff]
    %v1578 = vld [vmem:[#allocation9 + $0x740] sm:$0xff]
    %v1579 = vld [vmem:[#allocation9 + $0x748] sm:$0xff]
    %v1580 = vld [vmem:[#allocation9 + $0x750] sm:$0xff]
    %v1581 = vld [vmem:[#allocation9 + $0x758] sm:$0xff]
    %v1582 = vld [vmem:[#allocation9 + $0x760] sm:$0xff]
    %v1583 = vld [vmem:[#allocation9 + $0x768] sm:$0xff]
    %v1584 = vld [vmem:[#allocation9 + $0x770] sm:$0xff]
    %v1585 = vld [vmem:[#allocation9 + $0x778] sm:$0xff]
    %v1586 = vld [vmem:[#allocation9 + $0x780] sm:$0xff]
    %v1587 = vld [vmem:[#allocation9 + $0x788] sm:$0xff]
    %v1588 = vld [vmem:[#allocation9 + $0x790] sm:$0xff]
    %v1589 = vld [vmem:[#allocation9 + $0x798] sm:$0xff]
    %v1590 = vld [vmem:[#allocation9 + $0x7a0] sm:$0xff]
    %v1591 = vld [vmem:[#allocation9 + $0x7a8] sm:$0xff]
    %v1592 = vld [vmem:[#allocation9 + $0x7b0] sm:$0xff]
    %v1593 = vld [vmem:[#allocation9 + $0x7b8] sm:$0xff]
    %v1594 = vld [vmem:[#allocation9 + $0x7c0] sm:$0xff]
    %v1595 = vld [vmem:[#allocation9 + $0x7c8] sm:$0xff]
    %v1596 = vld [vmem:[#allocation9 + $0x7d0] sm:$0xff]
    %v1597 = vld [vmem:[#allocation9 + $0x7d8] sm:$0xff]
    %v1598 = vld [vmem:[#allocation9 + $0x7e0] sm:$0xff]
    %v1599 = vld [vmem:[#allocation9 + $0x7e8] sm:$0xff]
    %v1600 = vld [vmem:[#allocation9 + $0x7f0] sm:$0xff]
    %v1601 = vld [vmem:[#allocation9 + $0x7f8] sm:$0xff]
    %v1602 = vstv %s1345
    %v1603 = vmul.f32 %v1602, %v1346
    %v1604 = vmul.f32 %v1602, %v1347
    %v1605 = vmul.f32 %v1602, %v1348
    %v1606 = vmul.f32 %v1602, %v1349
    %v1607 = vmul.f32 %v1602, %v1350
    %v1608 = vmul.f32 %v1602, %v1351
    %v1609 = vmul.f32 %v1602, %v1352
    %v1610 = vmul.f32 %v1602, %v1353
    %v1611 = vmul.f32 %v1602, %v1354
    %v1612 = vmul.f32 %v1602, %v1355
    %v1613 = vmul.f32 %v1602, %v1356
    %v1614 = vmul.f32 %v1602, %v1357
    %v1615 = vmul.f32 %v1602, %v1358
    %v1616 = vmul.f32 %v1602, %v1359
    %v1617 = vmul.f32 %v1602, %v1360
    %v1618 = vmul.f32 %v1602, %v1361
    %v1619 = vmul.f32 %v1602, %v1362
    %v1620 = vmul.f32 %v1602, %v1363
    %v1621 = vmul.f32 %v1602, %v1364
    %v1622 = vmul.f32 %v1602, %v1365
    %v1623 = vmul.f32 %v1602, %v1366
    %v1624 = vmul.f32 %v1602, %v1367
    %v1625 = vmul.f32 %v1602, %v1368
    %v1626 = vmul.f32 %v1602, %v1369
    %v1627 = vmul.f32 %v1602, %v1370
    %v1628 = vmul.f32 %v1602, %v1371
    %v1629 = vmul.f32 %v1602, %v1372
    %v1630 = vmul.f32 %v1602, %v1373
    %v1631 = vmul.f32 %v1602, %v1374
    %v1632 = vmul.f32 %v1602, %v1375
    %v1633 = vmul.f32 %v1602, %v1376
    %v1634 = vmul.f32 %v1602, %v1377
    %v1635 = vmul.f32 %v1602, %v1378
    %v1636 = vmul.f32 %v1602, %v1379
    %v1637 = vmul.f32 %v1602, %v1380
    %v1638 = vmul.f32 %v1602, %v1381
    %v1639 = vmul.f32 %v1602, %v1382
    %v1640 = vmul.f32 %v1602, %v1383
    %v1641 = vmul.f32 %v1602, %v1384
    %v1642 = vmul.f32 %v1602, %v1385
    %v1643 = vmul.f32 %v1602, %v1386
    %v1644 = vmul.f32 %v1602, %v1387
    %v1645 = vmul.f32 %v1602, %v1388
    %v1646 = vmul.f32 %v1602, %v1389
    %v1647 = vmul.f32 %v1602, %v1390
    %v1648 = vmul.f32 %v1602, %v1391
    %v1649 = vmul.f32 %v1602, %v1392
    %v1650 = vmul.f32 %v1602, %v1393
    %v1651 = vmul.f32 %v1602, %v1394
    %v1652 = vmul.f32 %v1602, %v1395
    %v1653 = vmul.f32 %v1602, %v1396
    %v1654 = vmul.f32 %v1602, %v1397
    %v1655 = vmul.f32 %v1602, %v1398
    %v1656 = vmul.f32 %v1602, %v1399
    %v1657 = vmul.f32 %v1602, %v1400
    %v1658 = vmul.f32 %v1602, %v1401
    %v1659 = vmul.f32 %v1602, %v1402
    %v1660 = vmul.f32 %v1602, %v1403
    %v1661 = vmul.f32 %v1602, %v1404
    %v1662 = vmul.f32 %v1602, %v1405
    %v1663 = vmul.f32 %v1602, %v1406
    %v1664 = vmul.f32 %v1602, %v1407
    %v1665 = vmul.f32 %v1602, %v1408
    %v1666 = vmul.f32 %v1602, %v1409
    %v1667 = vmul.f32 %v1602, %v1410
    %v1668 = vmul.f32 %v1602, %v1411
    %v1669 = vmul.f32 %v1602, %v1412
    %v1670 = vmul.f32 %v1602, %v1413
    %v1671 = vmul.f32 %v1602, %v1414
    %v1672 = vmul.f32 %v1602, %v1415
    %v1673 = vmul.f32 %v1602, %v1416
    %v1674 = vmul.f32 %v1602, %v1417
    %v1675 = vmul.f32 %v1602, %v1418
    %v1676 = vmul.f32 %v1602, %v1419
    %v1677 = vmul.f32 %v1602, %v1420
    %v1678 = vmul.f32 %v1602, %v1421
    %v1679 = vmul.f32 %v1602, %v1422
    %v1680 = vmul.f32 %v1602, %v1423
    %v1681 = vmul.f32 %v1602, %v1424
    %v1682 = vmul.f32 %v1602, %v1425
    %v1683 = vmul.f32 %v1602, %v1426
    %v1684 = vmul.f32 %v1602, %v1427
    %v1685 = vmul.f32 %v1602, %v1428
    %v1686 = vmul.f32 %v1602, %v1429
    %v1687 = vmul.f32 %v1602, %v1430
    %v1688 = vmul.f32 %v1602, %v1431
    %v1689 = vmul.f32 %v1602, %v1432
    %v1690 = vmul.f32 %v1602, %v1433
    %v1691 = vmul.f32 %v1602, %v1434
    %v1692 = vmul.f32 %v1602, %v1435
    %v1693 = vmul.f32 %v1602, %v1436
    %v1694 = vmul.f32 %v1602, %v1437
    %v1695 = vmul.f32 %v1602, %v1438
    %v1696 = vmul.f32 %v1602, %v1439
    %v1697 = vmul.f32 %v1602, %v1440
    %v1698 = vmul.f32 %v1602, %v1441
    %v1699 = vmul.f32 %v1602, %v1442
    %v1700 = vmul.f32 %v1602, %v1443
    %v1701 = vmul.f32 %v1602, %v1444
    %v1702 = vmul.f32 %v1602, %v1445
    %v1703 = vmul.f32 %v1602, %v1446
    %v1704 = vmul.f32 %v1602, %v1447
    %v1705 = vmul.f32 %v1602, %v1448
    %v1706 = vmul.f32 %v1602, %v1449
    %v1707 = vmul.f32 %v1602, %v1450
    %v1708 = vmul.f32 %v1602, %v1451
    %v1709 = vmul.f32 %v1602, %v1452
    %v1710 = vmul.f32 %v1602, %v1453
    %v1711 = vmul.f32 %v1602, %v1454
    %v1712 = vmul.f32 %v1602, %v1455
    %v1713 = vmul.f32 %v1602, %v1456
    %v1714 = vmul.f32 %v1602, %v1457
    %v1715 = vmul.f32 %v1602, %v1458
    %v1716 = vmul.f32 %v1602, %v1459
    %v1717 = vmul.f32 %v1602, %v1460
    %v1718 = vmul.f32 %v1602, %v1461
    %v1719 = vmul.f32 %v1602, %v1462
    %v1720 = vmul.f32 %v1602, %v1463
    %v1721 = vmul.f32 %v1602, %v1464
    %v1722 = vmul.f32 %v1602, %v1465
    %v1723 = vmul.f32 %v1602, %v1466
    %v1724 = vmul.f32 %v1602, %v1467
    %v1725 = vmul.f32 %v1602, %v1468
    %v1726 = vmul.f32 %v1602, %v1469
    %v1727 = vmul.f32 %v1602, %v1470
    %v1728 = vmul.f32 %v1602, %v1471
    %v1729 = vmul.f32 %v1602, %v1472
    %v1730 = vmul.f32 %v1602, %v1473
    %v1731 = vmul.f32 %v1602, %v1474
    %v1732 = vmul.f32 %v1602, %v1475
    %v1733 = vmul.f32 %v1602, %v1476
    %v1734 = vmul.f32 %v1602, %v1477
    %v1735 = vmul.f32 %v1602, %v1478
    %v1736 = vmul.f32 %v1602, %v1479
    %v1737 = vmul.f32 %v1602, %v1480
    %v1738 = vmul.f32 %v1602, %v1481
    %v1739 = vmul.f32 %v1602, %v1482
    %v1740 = vmul.f32 %v1602, %v1483
    %v1741 = vmul.f32 %v1602, %v1484
    %v1742 = vmul.f32 %v1602, %v1485
    %v1743 = vmul.f32 %v1602, %v1486
    %v1744 = vmul.f32 %v1602, %v1487
    %v1745 = vmul.f32 %v1602, %v1488
    %v1746 = vmul.f32 %v1602, %v1489
    %v1747 = vmul.f32 %v1602, %v1490
    %v1748 = vmul.f32 %v1602, %v1491
    %v1749 = vmul.f32 %v1602, %v1492
    %v1750 = vmul.f32 %v1602, %v1493
    %v1751 = vmul.f32 %v1602, %v1494
    %v1752 = vmul.f32 %v1602, %v1495
    %v1753 = vmul.f32 %v1602, %v1496
    %v1754 = vmul.f32 %v1602, %v1497
    %v1755 = vmul.f32 %v1602, %v1498
    %v1756 = vmul.f32 %v1602, %v1499
    %v1757 = vmul.f32 %v1602, %v1500
    %v1758 = vmul.f32 %v1602, %v1501
    %v1759 = vmul.f32 %v1602, %v1502
    %v1760 = vmul.f32 %v1602, %v1503
    %v1761 = vmul.f32 %v1602, %v1504
    %v1762 = vmul.f32 %v1602, %v1505
    %v1763 = vmul.f32 %v1602, %v1506
    %v1764 = vmul.f32 %v1602, %v1507
    %v1765 = vmul.f32 %v1602, %v1508
    %v1766 = vmul.f32 %v1602, %v1509
    %v1767 = vmul.f32 %v1602, %v1510
    %v1768 = vmul.f32 %v1602, %v1511
    %v1769 = vmul.f32 %v1602, %v1512
    %v1770 = vmul.f32 %v1602, %v1513
    %v1771 = vmul.f32 %v1602, %v1514
    %v1772 = vmul.f32 %v1602, %v1515
    %v1773 = vmul.f32 %v1602, %v1516
    %v1774 = vmul.f32 %v1602, %v1517
    %v1775 = vmul.f32 %v1602, %v1518
    %v1776 = vmul.f32 %v1602, %v1519
    %v1777 = vmul.f32 %v1602, %v1520
    %v1778 = vmul.f32 %v1602, %v1521
    %v1779 = vmul.f32 %v1602, %v1522
    %v1780 = vmul.f32 %v1602, %v1523
    %v1781 = vmul.f32 %v1602, %v1524
    %v1782 = vmul.f32 %v1602, %v1525
    %v1783 = vmul.f32 %v1602, %v1526
    %v1784 = vmul.f32 %v1602, %v1527
    %v1785 = vmul.f32 %v1602, %v1528
    %v1786 = vmul.f32 %v1602, %v1529
    %v1787 = vmul.f32 %v1602, %v1530
    %v1788 = vmul.f32 %v1602, %v1531
    %v1789 = vmul.f32 %v1602, %v1532
    %v1790 = vmul.f32 %v1602, %v1533
    %v1791 = vmul.f32 %v1602, %v1534
    %v1792 = vmul.f32 %v1602, %v1535
    %v1793 = vmul.f32 %v1602, %v1536
    %v1794 = vmul.f32 %v1602, %v1537
    %v1795 = vmul.f32 %v1602, %v1538
    %v1796 = vmul.f32 %v1602, %v1539
    %v1797 = vmul.f32 %v1602, %v1540
    %v1798 = vmul.f32 %v1602, %v1541
    %v1799 = vmul.f32 %v1602, %v1542
    %v1800 = vmul.f32 %v1602, %v1543
    %v1801 = vmul.f32 %v1602, %v1544
    %v1802 = vmul.f32 %v1602, %v1545
    %v1803 = vmul.f32 %v1602, %v1546
    %v1804 = vmul.f32 %v1602, %v1547
    %v1805 = vmul.f32 %v1602, %v1548
    %v1806 = vmul.f32 %v1602, %v1549
    %v1807 = vmul.f32 %v1602, %v1550
    %v1808 = vmul.f32 %v1602, %v1551
    %v1809 = vmul.f32 %v1602, %v1552
    %v1810 = vmul.f32 %v1602, %v1553
    %v1811 = vmul.f32 %v1602, %v1554
    %v1812 = vmul.f32 %v1602, %v1555
    %v1813 = vmul.f32 %v1602, %v1556
    %v1814 = vmul.f32 %v1602, %v1557
    %v1815 = vmul.f32 %v1602, %v1558
    %v1816 = vmul.f32 %v1602, %v1559
    %v1817 = vmul.f32 %v1602, %v1560
    %v1818 = vmul.f32 %v1602, %v1561
    %v1819 = vmul.f32 %v1602, %v1562
    %v1820 = vmul.f32 %v1602, %v1563
    %v1821 = vmul.f32 %v1602, %v1564
    %v1822 = vmul.f32 %v1602, %v1565
    %v1823 = vmul.f32 %v1602, %v1566
    %v1824 = vmul.f32 %v1602, %v1567
    %v1825 = vmul.f32 %v1602, %v1568
    %v1826 = vmul.f32 %v1602, %v1569
    %v1827 = vmul.f32 %v1602, %v1570
    %v1828 = vmul.f32 %v1602, %v1571
    %v1829 = vmul.f32 %v1602, %v1572
    %v1830 = vmul.f32 %v1602, %v1573
    %v1831 = vmul.f32 %v1602, %v1574
    %v1832 = vmul.f32 %v1602, %v1575
    %v1833 = vmul.f32 %v1602, %v1576
    %v1834 = vmul.f32 %v1602, %v1577
    %v1835 = vmul.f32 %v1602, %v1578
    %v1836 = vmul.f32 %v1602, %v1579
    %v1837 = vmul.f32 %v1602, %v1580
    %v1838 = vmul.f32 %v1602, %v1581
    %v1839 = vmul.f32 %v1602, %v1582
    %v1840 = vmul.f32 %v1602, %v1583
    %v1841 = vmul.f32 %v1602, %v1584
    %v1842 = vmul.f32 %v1602, %v1585
    %v1843 = vmul.f32 %v1602, %v1586
    %v1844 = vmul.f32 %v1602, %v1587
    %v1845 = vmul.f32 %v1602, %v1588
    %v1846 = vmul.f32 %v1602, %v1589
    %v1847 = vmul.f32 %v1602, %v1590
    %v1848 = vmul.f32 %v1602, %v1591
    %v1849 = vmul.f32 %v1602, %v1592
    %v1850 = vmul.f32 %v1602, %v1593
    %v1851 = vmul.f32 %v1602, %v1594
    %v1852 = vmul.f32 %v1602, %v1595
    %v1853 = vmul.f32 %v1602, %v1596
    %v1854 = vmul.f32 %v1602, %v1597
    %v1855 = vmul.f32 %v1602, %v1598
    %v1856 = vmul.f32 %v1602, %v1599
    %v1857 = vmul.f32 %v1602, %v1600
    %v1858 = vmul.f32 %v1602, %v1601
    %v1859 = vadd.f32 %v1089, %v1603
    %v1860 = vadd.f32 %v1090, %v1604
    %v1861 = vadd.f32 %v1091, %v1605
    %v1862 = vadd.f32 %v1092, %v1606
    %v1863 = vadd.f32 %v1093, %v1607
    %v1864 = vadd.f32 %v1094, %v1608
    %v1865 = vadd.f32 %v1095, %v1609
    %v1866 = vadd.f32 %v1096, %v1610
    %v1867 = vadd.f32 %v1097, %v1611
    %v1868 = vadd.f32 %v1098, %v1612
    %v1869 = vadd.f32 %v1099, %v1613
    %v1870 = vadd.f32 %v1100, %v1614
    %v1871 = vadd.f32 %v1101, %v1615
    %v1872 = vadd.f32 %v1102, %v1616
    %v1873 = vadd.f32 %v1103, %v1617
    %v1874 = vadd.f32 %v1104, %v1618
    %v1875 = vadd.f32 %v1105, %v1619
    %v1876 = vadd.f32 %v1106, %v1620
    %v1877 = vadd.f32 %v1107, %v1621
    %v1878 = vadd.f32 %v1108, %v1622
    %v1879 = vadd.f32 %v1109, %v1623
    %v1880 = vadd.f32 %v1110, %v1624
    %v1881 = vadd.f32 %v1111, %v1625
    %v1882 = vadd.f32 %v1112, %v1626
    %v1883 = vadd.f32 %v1113, %v1627
    %v1884 = vadd.f32 %v1114, %v1628
    %v1885 = vadd.f32 %v1115, %v1629
    %v1886 = vadd.f32 %v1116, %v1630
    %v1887 = vadd.f32 %v1117, %v1631
    %v1888 = vadd.f32 %v1118, %v1632
    %v1889 = vadd.f32 %v1119, %v1633
    %v1890 = vadd.f32 %v1120, %v1634
    %v1891 = vadd.f32 %v1121, %v1635
    %v1892 = vadd.f32 %v1122, %v1636
    %v1893 = vadd.f32 %v1123, %v1637
    %v1894 = vadd.f32 %v1124, %v1638
    %v1895 = vadd.f32 %v1125, %v1639
    %v1896 = vadd.f32 %v1126, %v1640
    %v1897 = vadd.f32 %v1127, %v1641
    %v1898 = vadd.f32 %v1128, %v1642
    %v1899 = vadd.f32 %v1129, %v1643
    %v1900 = vadd.f32 %v1130, %v1644
    %v1901 = vadd.f32 %v1131, %v1645
    %v1902 = vadd.f32 %v1132, %v1646
    %v1903 = vadd.f32 %v1133, %v1647
    %v1904 = vadd.f32 %v1134, %v1648
    %v1905 = vadd.f32 %v1135, %v1649
    %v1906 = vadd.f32 %v1136, %v1650
    %v1907 = vadd.f32 %v1137, %v1651
    %v1908 = vadd.f32 %v1138, %v1652
    %v1909 = vadd.f32 %v1139, %v1653
    %v1910 = vadd.f32 %v1140, %v1654
    %v1911 = vadd.f32 %v1141, %v1655
    %v1912 = vadd.f32 %v1142, %v1656
    %v1913 = vadd.f32 %v1143, %v1657
    %v1914 = vadd.f32 %v1144, %v1658
    %v1915 = vadd.f32 %v1145, %v1659
    %v1916 = vadd.f32 %v1146, %v1660
    %v1917 = vadd.f32 %v1147, %v1661
    %v1918 = vadd.f32 %v1148, %v1662
    %v1919 = vadd.f32 %v1149, %v1663
    %v1920 = vadd.f32 %v1150, %v1664
    %v1921 = vadd.f32 %v1151, %v1665
    %v1922 = vadd.f32 %v1152, %v1666
    %v1923 = vadd.f32 %v1153, %v1667
    %v1924 = vadd.f32 %v1154, %v1668
    %v1925 = vadd.f32 %v1155, %v1669
    %v1926 = vadd.f32 %v1156, %v1670
    %v1927 = vadd.f32 %v1157, %v1671
    %v1928 = vadd.f32 %v1158, %v1672
    %v1929 = vadd.f32 %v1159, %v1673
    %v1930 = vadd.f32 %v1160, %v1674
    %v1931 = vadd.f32 %v1161, %v1675
    %v1932 = vadd.f32 %v1162, %v1676
    %v1933 = vadd.f32 %v1163, %v1677
    %v1934 = vadd.f32 %v1164, %v1678
    %v1935 = vadd.f32 %v1165, %v1679
    %v1936 = vadd.f32 %v1166, %v1680
    %v1937 = vadd.f32 %v1167, %v1681
    %v1938 = vadd.f32 %v1168, %v1682
    %v1939 = vadd.f32 %v1169, %v1683
    %v1940 = vadd.f32 %v1170, %v1684
    %v1941 = vadd.f32 %v1171, %v1685
    %v1942 = vadd.f32 %v1172, %v1686
    %v1943 = vadd.f32 %v1173, %v1687
    %v1944 = vadd.f32 %v1174, %v1688
    %v1945 = vadd.f32 %v1175, %v1689
    %v1946 = vadd.f32 %v1176, %v1690
    %v1947 = vadd.f32 %v1177, %v1691
    %v1948 = vadd.f32 %v1178, %v1692
    %v1949 = vadd.f32 %v1179, %v1693
    %v1950 = vadd.f32 %v1180, %v1694
    %v1951 = vadd.f32 %v1181, %v1695
    %v1952 = vadd.f32 %v1182, %v1696
    %v1953 = vadd.f32 %v1183, %v1697
    %v1954 = vadd.f32 %v1184, %v1698
    %v1955 = vadd.f32 %v1185, %v1699
    %v1956 = vadd.f32 %v1186, %v1700
    %v1957 = vadd.f32 %v1187, %v1701
    %v1958 = vadd.f32 %v1188, %v1702
    %v1959 = vadd.f32 %v1189, %v1703
    %v1960 = vadd.f32 %v1190, %v1704
    %v1961 = vadd.f32 %v1191, %v1705
    %v1962 = vadd.f32 %v1192, %v1706
    %v1963 = vadd.f32 %v1193, %v1707
    %v1964 = vadd.f32 %v1194, %v1708
    %v1965 = vadd.f32 %v1195, %v1709
    %v1966 = vadd.f32 %v1196, %v1710
    %v1967 = vadd.f32 %v1197, %v1711
    %v1968 = vadd.f32 %v1198, %v1712
    %v1969 = vadd.f32 %v1199, %v1713
    %v1970 = vadd.f32 %v1200, %v1714
    %v1971 = vadd.f32 %v1201, %v1715
    %v1972 = vadd.f32 %v1202, %v1716
    %v1973 = vadd.f32 %v1203, %v1717
    %v1974 = vadd.f32 %v1204, %v1718
    %v1975 = vadd.f32 %v1205, %v1719
    %v1976 = vadd.f32 %v1206, %v1720
    %v1977 = vadd.f32 %v1207, %v1721
    %v1978 = vadd.f32 %v1208, %v1722
    %v1979 = vadd.f32 %v1209, %v1723
    %v1980 = vadd.f32 %v1210, %v1724
    %v1981 = vadd.f32 %v1211, %v1725
    %v1982 = vadd.f32 %v1212, %v1726
    %v1983 = vadd.f32 %v1213, %v1727
    %v1984 = vadd.f32 %v1214, %v1728
    %v1985 = vadd.f32 %v1215, %v1729
    %v1986 = vadd.f32 %v1216, %v1730
    %v1987 = vadd.f32 %v1217, %v1731
    %v1988 = vadd.f32 %v1218, %v1732
    %v1989 = vadd.f32 %v1219, %v1733
    %v1990 = vadd.f32 %v1220, %v1734
    %v1991 = vadd.f32 %v1221, %v1735
    %v1992 = vadd.f32 %v1222, %v1736
    %v1993 = vadd.f32 %v1223, %v1737
    %v1994 = vadd.f32 %v1224, %v1738
    %v1995 = vadd.f32 %v1225, %v1739
    %v1996 = vadd.f32 %v1226, %v1740
    %v1997 = vadd.f32 %v1227, %v1741
    %v1998 = vadd.f32 %v1228, %v1742
    %v1999 = vadd.f32 %v1229, %v1743
    %v2000 = vadd.f32 %v1230, %v1744
    %v2001 = vadd.f32 %v1231, %v1745
    %v2002 = vadd.f32 %v1232, %v1746
    %v2003 = vadd.f32 %v1233, %v1747
    %v2004 = vadd.f32 %v1234, %v1748
    %v2005 = vadd.f32 %v1235, %v1749
    %v2006 = vadd.f32 %v1236, %v1750
    %v2007 = vadd.f32 %v1237, %v1751
    %v2008 = vadd.f32 %v1238, %v1752
    %v2009 = vadd.f32 %v1239, %v1753
    %v2010 = vadd.f32 %v1240, %v1754
    %v2011 = vadd.f32 %v1241, %v1755
    %v2012 = vadd.f32 %v1242, %v1756
    %v2013 = vadd.f32 %v1243, %v1757
    %v2014 = vadd.f32 %v1244, %v1758
    %v2015 = vadd.f32 %v1245, %v1759
    %v2016 = vadd.f32 %v1246, %v1760
    %v2017 = vadd.f32 %v1247, %v1761
    %v2018 = vadd.f32 %v1248, %v1762
    %v2019 = vadd.f32 %v1249, %v1763
    %v2020 = vadd.f32 %v1250, %v1764
    %v2021 = vadd.f32 %v1251, %v1765
    %v2022 = vadd.f32 %v1252, %v1766
    %v2023 = vadd.f32 %v1253, %v1767
    %v2024 = vadd.f32 %v1254, %v1768
    %v2025 = vadd.f32 %v1255, %v1769
    %v2026 = vadd.f32 %v1256, %v1770
    %v2027 = vadd.f32 %v1257, %v1771
    %v2028 = vadd.f32 %v1258, %v1772
    %v2029 = vadd.f32 %v1259, %v1773
    %v2030 = vadd.f32 %v1260, %v1774
    %v2031 = vadd.f32 %v1261, %v1775
    %v2032 = vadd.f32 %v1262, %v1776
    %v2033 = vadd.f32 %v1263, %v1777
    %v2034 = vadd.f32 %v1264, %v1778
    %v2035 = vadd.f32 %v1265, %v1779
    %v2036 = vadd.f32 %v1266, %v1780
    %v2037 = vadd.f32 %v1267, %v1781
    %v2038 = vadd.f32 %v1268, %v1782
    %v2039 = vadd.f32 %v1269, %v1783
    %v2040 = vadd.f32 %v1270, %v1784
    %v2041 = vadd.f32 %v1271, %v1785
    %v2042 = vadd.f32 %v1272, %v1786
    %v2043 = vadd.f32 %v1273, %v1787
    %v2044 = vadd.f32 %v1274, %v1788
    %v2045 = vadd.f32 %v1275, %v1789
    %v2046 = vadd.f32 %v1276, %v1790
    %v2047 = vadd.f32 %v1277, %v1791
    %v2048 = vadd.f32 %v1278, %v1792
    %v2049 = vadd.f32 %v1279, %v1793
    %v2050 = vadd.f32 %v1280, %v1794
    %v2051 = vadd.f32 %v1281, %v1795
    %v2052 = vadd.f32 %v1282, %v1796
    %v2053 = vadd.f32 %v1283, %v1797
    %v2054 = vadd.f32 %v1284, %v1798
    %v2055 = vadd.f32 %v1285, %v1799
    %v2056 = vadd.f32 %v1286, %v1800
    %v2057 = vadd.f32 %v1287, %v1801
    %v2058 = vadd.f32 %v1288, %v1802
    %v2059 = vadd.f32 %v1289, %v1803
    %v2060 = vadd.f32 %v1290, %v1804
    %v2061 = vadd.f32 %v1291, %v1805
    %v2062 = vadd.f32 %v1292, %v1806
    %v2063 = vadd.f32 %v1293, %v1807
    %v2064 = vadd.f32 %v1294, %v1808
    %v2065 = vadd.f32 %v1295, %v1809
    %v2066 = vadd.f32 %v1296, %v1810
    %v2067 = vadd.f32 %v1297, %v1811
    %v2068 = vadd.f32 %v1298, %v1812
    %v2069 = vadd.f32 %v1299, %v1813
    %v2070 = vadd.f32 %v1300, %v1814
    %v2071 = vadd.f32 %v1301, %v1815
    %v2072 = vadd.f32 %v1302, %v1816
    %v2073 = vadd.f32 %v1303, %v1817
    %v2074 = vadd.f32 %v1304, %v1818
    %v2075 = vadd.f32 %v1305, %v1819
    %v2076 = vadd.f32 %v1306, %v1820
    %v2077 = vadd.f32 %v1307, %v1821
    %v2078 = vadd.f32 %v1308, %v1822
    %v2079 = vadd.f32 %v1309, %v1823
    %v2080 = vadd.f32 %v1310, %v1824
    %v2081 = vadd.f32 %v1311, %v1825
    %v2082 = vadd.f32 %v1312, %v1826
    %v2083 = vadd.f32 %v1313, %v1827
    %v2084 = vadd.f32 %v1314, %v1828
    %v2085 = vadd.f32 %v1315, %v1829
    %v2086 = vadd.f32 %v1316, %v1830
    %v2087 = vadd.f32 %v1317, %v1831
    %v2088 = vadd.f32 %v1318, %v1832
    %v2089 = vadd.f32 %v1319, %v1833
    %v2090 = vadd.f32 %v1320, %v1834
    %v2091 = vadd.f32 %v1321, %v1835
    %v2092 = vadd.f32 %v1322, %v1836
    %v2093 = vadd.f32 %v1323, %v1837
    %v2094 = vadd.f32 %v1324, %v1838
    %v2095 = vadd.f32 %v1325, %v1839
    %v2096 = vadd.f32 %v1326, %v1840
    %v2097 = vadd.f32 %v1327, %v1841
    %v2098 = vadd.f32 %v1328, %v1842
    %v2099 = vadd.f32 %v1329, %v1843
    %v2100 = vadd.f32 %v1330, %v1844
    %v2101 = vadd.f32 %v1331, %v1845
    %v2102 = vadd.f32 %v1332, %v1846
    %v2103 = vadd.f32 %v1333, %v1847
    %v2104 = vadd.f32 %v1334, %v1848
    %v2105 = vadd.f32 %v1335, %v1849
    %v2106 = vadd.f32 %v1336, %v1850
    %v2107 = vadd.f32 %v1337, %v1851
    %v2108 = vadd.f32 %v1338, %v1852
    %v2109 = vadd.f32 %v1339, %v1853
    %v2110 = vadd.f32 %v1340, %v1854
    %v2111 = vadd.f32 %v1341, %v1855
    %v2112 = vadd.f32 %v1342, %v1856
    %v2113 = vadd.f32 %v1343, %v1857
    %v2114 = vadd.f32 %v1344, %v1858
    %2115 = vst [vmem:[#allocation10] sm:$0xff] %v1859
    %2116 = vst [vmem:[#allocation10 + $0x8] sm:$0xff] %v1860
    %2117 = vst [vmem:[#allocation10 + $0x10] sm:$0xff] %v1861
    %2118 = vst [vmem:[#allocation10 + $0x18] sm:$0xff] %v1862
    %2119 = vst [vmem:[#allocation10 + $0x20] sm:$0xff] %v1863
    %2120 = vst [vmem:[#allocation10 + $0x28] sm:$0xff] %v1864
    %2121 = vst [vmem:[#allocation10 + $0x30] sm:$0xff] %v1865
    %2122 = vst [vmem:[#allocation10 + $0x38] sm:$0xff] %v1866
    %2123 = vst [vmem:[#allocation10 + $0x40] sm:$0xff] %v1867
    %2124 = vst [vmem:[#allocation10 + $0x48] sm:$0xff] %v1868
    %2125 = vst [vmem:[#allocation10 + $0x50] sm:$0xff] %v1869
    %2126 = vst [vmem:[#allocation10 + $0x58] sm:$0xff] %v1870
    %2127 = vst [vmem:[#allocation10 + $0x60] sm:$0xff] %v1871
    %2128 = vst [vmem:[#allocation10 + $0x68] sm:$0xff] %v1872
    %2129 = vst [vmem:[#allocation10 + $0x70] sm:$0xff] %v1873
    %2130 = vst [vmem:[#allocation10 + $0x78] sm:$0xff] %v1874
    %2131 = vst [vmem:[#allocation10 + $0x80] sm:$0xff] %v1875
    %2132 = vst [vmem:[#allocation10 + $0x88] sm:$0xff] %v1876
    %2133 = vst [vmem:[#allocation10 + $0x90] sm:$0xff] %v1877
    %2134 = vst [vmem:[#allocation10 + $0x98] sm:$0xff] %v1878
    %2135 = vst [vmem:[#allocation10 + $0xa0] sm:$0xff] %v1879
    %2136 = vst [vmem:[#allocation10 + $0xa8] sm:$0xff] %v1880
    %2137 = vst [vmem:[#allocation10 + $0xb0] sm:$0xff] %v1881
    %2138 = vst [vmem:[#allocation10 + $0xb8] sm:$0xff] %v1882
    %2139 = vst [vmem:[#allocation10 + $0xc0] sm:$0xff] %v1883
    %2140 = vst [vmem:[#allocation10 + $0xc8] sm:$0xff] %v1884
    %2141 = vst [vmem:[#allocation10 + $0xd0] sm:$0xff] %v1885
    %2142 = vst [vmem:[#allocation10 + $0xd8] sm:$0xff] %v1886
    %2143 = vst [vmem:[#allocation10 + $0xe0] sm:$0xff] %v1887
    %2144 = vst [vmem:[#allocation10 + $0xe8] sm:$0xff] %v1888
    %2145 = vst [vmem:[#allocation10 + $0xf0] sm:$0xff] %v1889
    %2146 = vst [vmem:[#allocation10 + $0xf8] sm:$0xff] %v1890
    %2147 = vst [vmem:[#allocation10 + $0x100] sm:$0xff] %v1891
    %2148 = vst [vmem:[#allocation10 + $0x108] sm:$0xff] %v1892
    %2149 = vst [vmem:[#allocation10 + $0x110] sm:$0xff] %v1893
    %2150 = vst [vmem:[#allocation10 + $0x118] sm:$0xff] %v1894
    %2151 = vst [vmem:[#allocation10 + $0x120] sm:$0xff] %v1895
    %2152 = vst [vmem:[#allocation10 + $0x128] sm:$0xff] %v1896
    %2153 = vst [vmem:[#allocation10 + $0x130] sm:$0xff] %v1897
    %2154 = vst [vmem:[#allocation10 + $0x138] sm:$0xff] %v1898
    %2155 = vst [vmem:[#allocation10 + $0x140] sm:$0xff] %v1899
    %2156 = vst [vmem:[#allocation10 + $0x148] sm:$0xff] %v1900
    %2157 = vst [vmem:[#allocation10 + $0x150] sm:$0xff] %v1901
    %2158 = vst [vmem:[#allocation10 + $0x158] sm:$0xff] %v1902
    %2159 = vst [vmem:[#allocation10 + $0x160] sm:$0xff] %v1903
    %2160 = vst [vmem:[#allocation10 + $0x168] sm:$0xff] %v1904
    %2161 = vst [vmem:[#allocation10 + $0x170] sm:$0xff] %v1905
    %2162 = vst [vmem:[#allocation10 + $0x178] sm:$0xff] %v1906
    %2163 = vst [vmem:[#allocation10 + $0x180] sm:$0xff] %v1907
    %2164 = vst [vmem:[#allocation10 + $0x188] sm:$0xff] %v1908
    %2165 = vst [vmem:[#allocation10 + $0x190] sm:$0xff] %v1909
    %2166 = vst [vmem:[#allocation10 + $0x198] sm:$0xff] %v1910
    %2167 = vst [vmem:[#allocation10 + $0x1a0] sm:$0xff] %v1911
    %2168 = vst [vmem:[#allocation10 + $0x1a8] sm:$0xff] %v1912
    %2169 = vst [vmem:[#allocation10 + $0x1b0] sm:$0xff] %v1913
    %2170 = vst [vmem:[#allocation10 + $0x1b8] sm:$0xff] %v1914
    %2171 = vst [vmem:[#allocation10 + $0x1c0] sm:$0xff] %v1915
    %2172 = vst [vmem:[#allocation10 + $0x1c8] sm:$0xff] %v1916
    %2173 = vst [vmem:[#allocation10 + $0x1d0] sm:$0xff] %v1917
    %2174 = vst [vmem:[#allocation10 + $0x1d8] sm:$0xff] %v1918
    %2175 = vst [vmem:[#allocation10 + $0x1e0] sm:$0xff] %v1919
    %2176 = vst [vmem:[#allocation10 + $0x1e8] sm:$0xff] %v1920
    %2177 = vst [vmem:[#allocation10 + $0x1f0] sm:$0xff] %v1921
    %2178 = vst [vmem:[#allocation10 + $0x1f8] sm:$0xff] %v1922
    %2179 = vst [vmem:[#allocation10 + $0x200] sm:$0xff] %v1923
    %2180 = vst [vmem:[#allocation10 + $0x208] sm:$0xff] %v1924
    %2181 = vst [vmem:[#allocation10 + $0x210] sm:$0xff] %v1925
    %2182 = vst [vmem:[#allocation10 + $0x218] sm:$0xff] %v1926
    %2183 = vst [vmem:[#allocation10 + $0x220] sm:$0xff] %v1927
    %2184 = vst [vmem:[#allocation10 + $0x228] sm:$0xff] %v1928
    %2185 = vst [vmem:[#allocation10 + $0x230] sm:$0xff] %v1929
    %2186 = vst [vmem:[#allocation10 + $0x238] sm:$0xff] %v1930
    %2187 = vst [vmem:[#allocation10 + $0x240] sm:$0xff] %v1931
    %2188 = vst [vmem:[#allocation10 + $0x248] sm:$0xff] %v1932
    %2189 = vst [vmem:[#allocation10 + $0x250] sm:$0xff] %v1933
    %2190 = vst [vmem:[#allocation10 + $0x258] sm:$0xff] %v1934
    %2191 = vst [vmem:[#allocation10 + $0x260] sm:$0xff] %v1935
    %2192 = vst [vmem:[#allocation10 + $0x268] sm:$0xff] %v1936
    %2193 = vst [vmem:[#allocation10 + $0x270] sm:$0xff] %v1937
    %2194 = vst [vmem:[#allocation10 + $0x278] sm:$0xff] %v1938
    %2195 = vst [vmem:[#allocation10 + $0x280] sm:$0xff] %v1939
    %2196 = vst [vmem:[#allocation10 + $0x288] sm:$0xff] %v1940
    %2197 = vst [vmem:[#allocation10 + $0x290] sm:$0xff] %v1941
    %2198 = vst [vmem:[#allocation10 + $0x298] sm:$0xff] %v1942
    %2199 = vst [vmem:[#allocation10 + $0x2a0] sm:$0xff] %v1943
    %2200 = vst [vmem:[#allocation10 + $0x2a8] sm:$0xff] %v1944
    %2201 = vst [vmem:[#allocation10 + $0x2b0] sm:$0xff] %v1945
    %2202 = vst [vmem:[#allocation10 + $0x2b8] sm:$0xff] %v1946
    %2203 = vst [vmem:[#allocation10 + $0x2c0] sm:$0xff] %v1947
    %2204 = vst [vmem:[#allocation10 + $0x2c8] sm:$0xff] %v1948
    %2205 = vst [vmem:[#allocation10 + $0x2d0] sm:$0xff] %v1949
    %2206 = vst [vmem:[#allocation10 + $0x2d8] sm:$0xff] %v1950
    %2207 = vst [vmem:[#allocation10 + $0x2e0] sm:$0xff] %v1951
    %2208 = vst [vmem:[#allocation10 + $0x2e8] sm:$0xff] %v1952
    %2209 = vst [vmem:[#allocation10 + $0x2f0] sm:$0xff] %v1953
    %2210 = vst [vmem:[#allocation10 + $0x2f8] sm:$0xff] %v1954
    %2211 = vst [vmem:[#allocation10 + $0x300] sm:$0xff] %v1955
    %2212 = vst [vmem:[#allocation10 + $0x308] sm:$0xff] %v1956
    %2213 = vst [vmem:[#allocation10 + $0x310] sm:$0xff] %v1957
    %2214 = vst [vmem:[#allocation10 + $0x318] sm:$0xff] %v1958
    %2215 = vst [vmem:[#allocation10 + $0x320] sm:$0xff] %v1959
    %2216 = vst [vmem:[#allocation10 + $0x328] sm:$0xff] %v1960
    %2217 = vst [vmem:[#allocation10 + $0x330] sm:$0xff] %v1961
    %2218 = vst [vmem:[#allocation10 + $0x338] sm:$0xff] %v1962
    %2219 = vst [vmem:[#allocation10 + $0x340] sm:$0xff] %v1963
    %2220 = vst [vmem:[#allocation10 + $0x348] sm:$0xff] %v1964
    %2221 = vst [vmem:[#allocation10 + $0x350] sm:$0xff] %v1965
    %2222 = vst [vmem:[#allocation10 + $0x358] sm:$0xff] %v1966
    %2223 = vst [vmem:[#allocation10 + $0x360] sm:$0xff] %v1967
    %2224 = vst [vmem:[#allocation10 + $0x368] sm:$0xff] %v1968
    %2225 = vst [vmem:[#allocation10 + $0x370] sm:$0xff] %v1969
    %2226 = vst [vmem:[#allocation10 + $0x378] sm:$0xff] %v1970
    %2227 = vst [vmem:[#allocation10 + $0x380] sm:$0xff] %v1971
    %2228 = vst [vmem:[#allocation10 + $0x388] sm:$0xff] %v1972
    %2229 = vst [vmem:[#allocation10 + $0x390] sm:$0xff] %v1973
    %2230 = vst [vmem:[#allocation10 + $0x398] sm:$0xff] %v1974
    %2231 = vst [vmem:[#allocation10 + $0x3a0] sm:$0xff] %v1975
    %2232 = vst [vmem:[#allocation10 + $0x3a8] sm:$0xff] %v1976
    %2233 = vst [vmem:[#allocation10 + $0x3b0] sm:$0xff] %v1977
    %2234 = vst [vmem:[#allocation10 + $0x3b8] sm:$0xff] %v1978
    %2235 = vst [vmem:[#allocation10 + $0x3c0] sm:$0xff] %v1979
    %2236 = vst [vmem:[#allocation10 + $0x3c8] sm:$0xff] %v1980
    %2237 = vst [vmem:[#allocation10 + $0x3d0] sm:$0xff] %v1981
    %2238 = vst [vmem:[#allocation10 + $0x3d8] sm:$0xff] %v1982
    %2239 = vst [vmem:[#allocation10 + $0x3e0] sm:$0xff] %v1983
    %2240 = vst [vmem:[#allocation10 + $0x3e8] sm:$0xff] %v1984
    %2241 = vst [vmem:[#allocation10 + $0x3f0] sm:$0xff] %v1985
    %2242 = vst [vmem:[#allocation10 + $0x3f8] sm:$0xff] %v1986
    %2243 = vst [vmem:[#allocation10 + $0x400] sm:$0xff] %v1987
    %2244 = vst [vmem:[#allocation10 + $0x408] sm:$0xff] %v1988
    %2245 = vst [vmem:[#allocation10 + $0x410] sm:$0xff] %v1989
    %2246 = vst [vmem:[#allocation10 + $0x418] sm:$0xff] %v1990
    %2247 = vst [vmem:[#allocation10 + $0x420] sm:$0xff] %v1991
    %2248 = vst [vmem:[#allocation10 + $0x428] sm:$0xff] %v1992
    %2249 = vst [vmem:[#allocation10 + $0x430] sm:$0xff] %v1993
    %2250 = vst [vmem:[#allocation10 + $0x438] sm:$0xff] %v1994
    %2251 = vst [vmem:[#allocation10 + $0x440] sm:$0xff] %v1995
    %2252 = vst [vmem:[#allocation10 + $0x448] sm:$0xff] %v1996
    %2253 = vst [vmem:[#allocation10 + $0x450] sm:$0xff] %v1997
    %2254 = vst [vmem:[#allocation10 + $0x458] sm:$0xff] %v1998
    %2255 = vst [vmem:[#allocation10 + $0x460] sm:$0xff] %v1999
    %2256 = vst [vmem:[#allocation10 + $0x468] sm:$0xff] %v2000
    %2257 = vst [vmem:[#allocation10 + $0x470] sm:$0xff] %v2001
    %2258 = vst [vmem:[#allocation10 + $0x478] sm:$0xff] %v2002
    %2259 = vst [vmem:[#allocation10 + $0x480] sm:$0xff] %v2003
    %2260 = vst [vmem:[#allocation10 + $0x488] sm:$0xff] %v2004
    %2261 = vst [vmem:[#allocation10 + $0x490] sm:$0xff] %v2005
    %2262 = vst [vmem:[#allocation10 + $0x498] sm:$0xff] %v2006
    %2263 = vst [vmem:[#allocation10 + $0x4a0] sm:$0xff] %v2007
    %2264 = vst [vmem:[#allocation10 + $0x4a8] sm:$0xff] %v2008
    %2265 = vst [vmem:[#allocation10 + $0x4b0] sm:$0xff] %v2009
    %2266 = vst [vmem:[#allocation10 + $0x4b8] sm:$0xff] %v2010
    %2267 = vst [vmem:[#allocation10 + $0x4c0] sm:$0xff] %v2011
    %2268 = vst [vmem:[#allocation10 + $0x4c8] sm:$0xff] %v2012
    %2269 = vst [vmem:[#allocation10 + $0x4d0] sm:$0xff] %v2013
    %2270 = vst [vmem:[#allocation10 + $0x4d8] sm:$0xff] %v2014
    %2271 = vst [vmem:[#allocation10 + $0x4e0] sm:$0xff] %v2015
    %2272 = vst [vmem:[#allocation10 + $0x4e8] sm:$0xff] %v2016
    %2273 = vst [vmem:[#allocation10 + $0x4f0] sm:$0xff] %v2017
    %2274 = vst [vmem:[#allocation10 + $0x4f8] sm:$0xff] %v2018
    %2275 = vst [vmem:[#allocation10 + $0x500] sm:$0xff] %v2019
    %2276 = vst [vmem:[#allocation10 + $0x508] sm:$0xff] %v2020
    %2277 = vst [vmem:[#allocation10 + $0x510] sm:$0xff] %v2021
    %2278 = vst [vmem:[#allocation10 + $0x518] sm:$0xff] %v2022
    %2279 = vst [vmem:[#allocation10 + $0x520] sm:$0xff] %v2023
    %2280 = vst [vmem:[#allocation10 + $0x528] sm:$0xff] %v2024
    %2281 = vst [vmem:[#allocation10 + $0x530] sm:$0xff] %v2025
    %2282 = vst [vmem:[#allocation10 + $0x538] sm:$0xff] %v2026
    %2283 = vst [vmem:[#allocation10 + $0x540] sm:$0xff] %v2027
    %2284 = vst [vmem:[#allocation10 + $0x548] sm:$0xff] %v2028
    %2285 = vst [vmem:[#allocation10 + $0x550] sm:$0xff] %v2029
    %2286 = vst [vmem:[#allocation10 + $0x558] sm:$0xff] %v2030
    %2287 = vst [vmem:[#allocation10 + $0x560] sm:$0xff] %v2031
    %2288 = vst [vmem:[#allocation10 + $0x568] sm:$0xff] %v2032
    %2289 = vst [vmem:[#allocation10 + $0x570] sm:$0xff] %v2033
    %2290 = vst [vmem:[#allocation10 + $0x578] sm:$0xff] %v2034
    %2291 = vst [vmem:[#allocation10 + $0x580] sm:$0xff] %v2035
    %2292 = vst [vmem:[#allocation10 + $0x588] sm:$0xff] %v2036
    %2293 = vst [vmem:[#allocation10 + $0x590] sm:$0xff] %v2037
    %2294 = vst [vmem:[#allocation10 + $0x598] sm:$0xff] %v2038
    %2295 = vst [vmem:[#allocation10 + $0x5a0] sm:$0xff] %v2039
    %2296 = vst [vmem:[#allocation10 + $0x5a8] sm:$0xff] %v2040
    %2297 = vst [vmem:[#allocation10 + $0x5b0] sm:$0xff] %v2041
    %2298 = vst [vmem:[#allocation10 + $0x5b8] sm:$0xff] %v2042
    %2299 = vst [vmem:[#allocation10 + $0x5c0] sm:$0xff] %v2043
    %2300 = vst [vmem:[#allocation10 + $0x5c8] sm:$0xff] %v2044
    %2301 = vst [vmem:[#allocation10 + $0x5d0] sm:$0xff] %v2045
    %2302 = vst [vmem:[#allocation10 + $0x5d8] sm:$0xff] %v2046
    %2303 = vst [vmem:[#allocation10 + $0x5e0] sm:$0xff] %v2047
    %2304 = vst [vmem:[#allocation10 + $0x5e8] sm:$0xff] %v2048
    %2305 = vst [vmem:[#allocation10 + $0x5f0] sm:$0xff] %v2049
    %2306 = vst [vmem:[#allocation10 + $0x5f8] sm:$0xff] %v2050
    %2307 = vst [vmem:[#allocation10 + $0x600] sm:$0xff] %v2051
    %2308 = vst [vmem:[#allocation10 + $0x608] sm:$0xff] %v2052
    %2309 = vst [vmem:[#allocation10 + $0x610] sm:$0xff] %v2053
    %2310 = vst [vmem:[#allocation10 + $0x618] sm:$0xff] %v2054
    %2311 = vst [vmem:[#allocation10 + $0x620] sm:$0xff] %v2055
    %2312 = vst [vmem:[#allocation10 + $0x628] sm:$0xff] %v2056
    %2313 = vst [vmem:[#allocation10 + $0x630] sm:$0xff] %v2057
    %2314 = vst [vmem:[#allocation10 + $0x638] sm:$0xff] %v2058
    %2315 = vst [vmem:[#allocation10 + $0x640] sm:$0xff] %v2059
    %2316 = vst [vmem:[#allocation10 + $0x648] sm:$0xff] %v2060
    %2317 = vst [vmem:[#allocation10 + $0x650] sm:$0xff] %v2061
    %2318 = vst [vmem:[#allocation10 + $0x658] sm:$0xff] %v2062
    %2319 = vst [vmem:[#allocation10 + $0x660] sm:$0xff] %v2063
    %2320 = vst [vmem:[#allocation10 + $0x668] sm:$0xff] %v2064
    %2321 = vst [vmem:[#allocation10 + $0x670] sm:$0xff] %v2065
    %2322 = vst [vmem:[#allocation10 + $0x678] sm:$0xff] %v2066
    %2323 = vst [vmem:[#allocation10 + $0x680] sm:$0xff] %v2067
    %2324 = vst [vmem:[#allocation10 + $0x688] sm:$0xff] %v2068
    %2325 = vst [vmem:[#allocation10 + $0x690] sm:$0xff] %v2069
    %2326 = vst [vmem:[#allocation10 + $0x698] sm:$0xff] %v2070
    %2327 = vst [vmem:[#allocation10 + $0x6a0] sm:$0xff] %v2071
    %2328 = vst [vmem:[#allocation10 + $0x6a8] sm:$0xff] %v2072
    %2329 = vst [vmem:[#allocation10 + $0x6b0] sm:$0xff] %v2073
    %2330 = vst [vmem:[#allocation10 + $0x6b8] sm:$0xff] %v2074
    %2331 = vst [vmem:[#allocation10 + $0x6c0] sm:$0xff] %v2075
    %2332 = vst [vmem:[#allocation10 + $0x6c8] sm:$0xff] %v2076
    %2333 = vst [vmem:[#allocation10 + $0x6d0] sm:$0xff] %v2077
    %2334 = vst [vmem:[#allocation10 + $0x6d8] sm:$0xff] %v2078
    %2335 = vst [vmem:[#allocation10 + $0x6e0] sm:$0xff] %v2079
    %2336 = vst [vmem:[#allocation10 + $0x6e8] sm:$0xff] %v2080
    %2337 = vst [vmem:[#allocation10 + $0x6f0] sm:$0xff] %v2081
    %2338 = vst [vmem:[#allocation10 + $0x6f8] sm:$0xff] %v2082
    %2339 = vst [vmem:[#allocation10 + $0x700] sm:$0xff] %v2083
    %2340 = vst [vmem:[#allocation10 + $0x708] sm:$0xff] %v2084
    %2341 = vst [vmem:[#allocation10 + $0x710] sm:$0xff] %v2085
    %2342 = vst [vmem:[#allocation10 + $0x718] sm:$0xff] %v2086
    %2343 = vst [vmem:[#allocation10 + $0x720] sm:$0xff] %v2087
    %2344 = vst [vmem:[#allocation10 + $0x728] sm:$0xff] %v2088
    %2345 = vst [vmem:[#allocation10 + $0x730] sm:$0xff] %v2089
    %2346 = vst [vmem:[#allocation10 + $0x738] sm:$0xff] %v2090
    %2347 = vst [vmem:[#allocation10 + $0x740] sm:$0xff] %v2091
    %2348 = vst [vmem:[#allocation10 + $0x748] sm:$0xff] %v2092
    %2349 = vst [vmem:[#allocation10 + $0x750] sm:$0xff] %v2093
    %2350 = vst [vmem:[#allocation10 + $0x758] sm:$0xff] %v2094
    %2351 = vst [vmem:[#allocation10 + $0x760] sm:$0xff] %v2095
    %2352 = vst [vmem:[#allocation10 + $0x768] sm:$0xff] %v2096
    %2353 = vst [vmem:[#allocation10 + $0x770] sm:$0xff] %v2097
    %2354 = vst [vmem:[#allocation10 + $0x778] sm:$0xff] %v2098
    %2355 = vst [vmem:[#allocation10 + $0x780] sm:$0xff] %v2099
    %2356 = vst [vmem:[#allocation10 + $0x788] sm:$0xff] %v2100
    %2357 = vst [vmem:[#allocation10 + $0x790] sm:$0xff] %v2101
    %2358 = vst [vmem:[#allocation10 + $0x798] sm:$0xff] %v2102
    %2359 = vst [vmem:[#allocation10 + $0x7a0] sm:$0xff] %v2103
    %2360 = vst [vmem:[#allocation10 + $0x7a8] sm:$0xff] %v2104
    %2361 = vst [vmem:[#allocation10 + $0x7b0] sm:$0xff] %v2105
    %2362 = vst [vmem:[#allocation10 + $0x7b8] sm:$0xff] %v2106
    %2363 = vst [vmem:[#allocation10 + $0x7c0] sm:$0xff] %v2107
    %2364 = vst [vmem:[#allocation10 + $0x7c8] sm:$0xff] %v2108
    %2365 = vst [vmem:[#allocation10 + $0x7d0] sm:$0xff] %v2109
    %2366 = vst [vmem:[#allocation10 + $0x7d8] sm:$0xff] %v2110
    %2367 = vst [vmem:[#allocation10 + $0x7e0] sm:$0xff] %v2111
    %2368 = vst [vmem:[#allocation10 + $0x7e8] sm:$0xff] %v2112
    %2369 = vst [vmem:[#allocation10 + $0x7f0] sm:$0xff] %v2113
    %2370 = vst [vmem:[#allocation10 + $0x7f8] sm:$0xff] %v2114
    // Predicated region
    $region26: #{tpu_custom_call.1} parent=1 // pred_check
      _
    $region27: #{tpu_custom_call.1} parent=1 // pred_check_branch
      %2372 = sbr.rel (0) target = $region29
    $region28: #{tpu_custom_call.1} parent=1 // pred_region
      %s2374 = ssub.s32 32768, 32768
      %2375 = vsyncadd [#allocation6], %s2374
      %s2376 = sshll.u32 [#allocation10], 4
      %s2377 = int_to_ptr.vmem [resolvable:$true] %s2376
      %2382 = dma.vmem_to_hbm [thread:$0]  %s2377, 32768, %s4, [#allocation6], 2048, 2048, 128
    $region29: #{tpu_custom_call.1} parent=1 // pred_fallthru
      _
    // Predicated region
    $region30: #{tpu_custom_call.1} parent=1 // pred_check
      _
    $region31: #{tpu_custom_call.1} parent=1 // pred_check_branch
      %2384 = sbr.rel (0) target = $region33
    $region32: #{tpu_custom_call.1} parent=1 // pred_region
      %2385 = dma.done [#allocation6], 32768
    $region33: #{tpu_custom_call.1} parent=1 // pred_fallthru
      _
    %2386 = vsyncpa [#allocation5], 1
    %2387 = vsyncpa [#allocation8], 1
    %2388 = vsyncpa [#allocation6], 1

</llo_original>
